<compile_context>
chip_gen: v7x
topology: tpu7x:2x2x1
jax: 0.10.0
libtpu: 0.0.40
codegen_flags: <defaults>
</compile_context>

<pallas_src>
import math

import jax
import jax.numpy as jnp
from jax import lax
from jax.experimental import pallas as pl
from jax.experimental.pallas import tpu as pltpu

# ---------------- model dims (small, consistent with the module) -------------
B = 2        # batch
S = 8        # sequence length
D = 32       # embedding_dim
H = 4        # num_heads
DH = D // H  # head dim
M = 64       # mlp_size
EPS = 1e-5   # nn.LayerNorm default eps


def _layernorm(x, gamma, beta):
    # gamma/beta are (1, D) rows -> broadcast directly against (rows, D)
    mu = jnp.mean(x, axis=-1, keepdims=True)
    var = jnp.mean((x - mu) ** 2, axis=-1, keepdims=True)
    return (x - mu) * lax.rsqrt(var + EPS) * gamma + beta


def _gelu_exact(x):
    # nn.GELU() default = exact erf formulation
    return 0.5 * x * (1.0 + lax.erf(x * (1.0 / math.sqrt(2.0))))


def encoder_kernel(x_ref,
                   ln1g_ref, ln1b_ref,
                   wqkv_ref, bqkv_ref,
                   wo_ref, bo_ref,
                   ln2g_ref, ln2b_ref,
                   w1_ref, b1_ref, w2_ref, b2_ref,
                   o_ref):
    # single invocation: everything (x, weights, intermediates) is VMEM-resident
    x = x_ref[...].astype(jnp.float32)                     # (B*S, D)

    # ---- equation2_layer: LN1 + multi-head self-attention ----
    xn = _layernorm(x, ln1g_ref[...], ln1b_ref[...])       # (B*S, D)

    # fused QKV: one (B*S, D) @ (D, 3D) MXU push instead of three
    qkv = jnp.dot(xn, wqkv_ref[...],
                  preferred_element_type=jnp.float32) + bqkv_ref[...]   # (B*S, 3D)
    q = qkv[:, 0 * D:1 * D]
    k = qkv[:, 1 * D:2 * D]
    v = qkv[:, 2 * D:3 * D]

    # stack all (batch, head) tiles along the leading axis (sublane-group
    # stacking only, last two dims untouched -> no lane relayout), so the
    # score / softmax / PV stages each run once over all B*H heads.
    def stack_heads(t):                                    # (B*S, D) -> (B*H, S, DH)
        return jnp.stack(
            [t[b * S:(b + 1) * S, h * DH:(h + 1) * DH]
             for b in range(B) for h in range(H)], axis=0)

    qh = stack_heads(q)
    kh = stack_heads(k)
    vh = stack_heads(v)

    scale = 1.0 / math.sqrt(DH)
    s = jnp.einsum('nqd,nkd->nqk', qh, kh,
                   preferred_element_type=jnp.float32) * scale          # (B*H, S, S)
    # single softmax pass over the packed buffer (per-row == per-head, correct)
    s = s - jnp.max(s, axis=-1, keepdims=True)
    p = jnp.exp(s)
    denom = jnp.sum(p, axis=-1, keepdims=True)
    p = p * pl.reciprocal(denom, approx=False)             # exact: keeps 1e-4 tol
    o = jnp.einsum('nqk,nkd->nqd', p, vh,
                   preferred_element_type=jnp.float32)                  # (B*H, S, DH)

    # unstack back to (B*S, D): lane-concat heads, sublane-concat batches
    attn = jnp.concatenate(
        [jnp.concatenate([o[b * H + h] for h in range(H)], axis=-1)
         for b in range(B)], axis=0)                                    # (B*S, D)

    attn = jnp.dot(attn, wo_ref[...],
                   preferred_element_type=jnp.float32) + bo_ref[...]
    x1 = x + attn                                          # residual 1

    # ---- equation3_layer: LN2 + MLP (Linear -> GELU -> Linear) ----
    xn2 = _layernorm(x1, ln2g_ref[...], ln2b_ref[...])
    hmid = jnp.dot(xn2, w1_ref[...],
                   preferred_element_type=jnp.float32) + b1_ref[...]    # (B*S, M)
    hmid = _gelu_exact(hmid)
    mlp = jnp.dot(hmid, w2_ref[...],
                  preferred_element_type=jnp.float32) + b2_ref[...]     # (B*S, D)

    o_ref[...] = (x1 + mlp).astype(o_ref.dtype)            # residual 2


def transformer_encoder(x, params):
    (ln1g, ln1b, wq, wk, wv, bq, bk, bv, wo, bo,
     ln2g, ln2b, w1, b1, w2, b2) = params

    # wrapper-side fusion of the QKV weights/biases (free XLA concat)
    wqkv = jnp.concatenate([wq, wk, wv], axis=1)           # (D, 3D)
    bqkv = jnp.concatenate([bq, bk, bv], axis=1)           # (1, 3D)

    x2d = x.reshape(B * S, D)                              # row-wise slab for the kernel

    out2d = pl.pallas_call(
        encoder_kernel,
        out_shape=jax.ShapeDtypeStruct((B * S, D), x.dtype),
        # no grid: single step, whole problem resident in VMEM (footprint ~30 KB)
    )(x2d, ln1g, ln1b, wqkv, bqkv, wo, bo, ln2g, ln2b, w1, b1, w2, b2)

    return out2d.reshape(B, S, D)


# ----------------------------- reference (pure JAX) --------------------------
def reference(x, params):
    (ln1g, ln1b, wq, wk, wv, bq, bk, bv, wo, bo,
     ln2g, ln2b, w1, b1, w2, b2) = params
    xf = x.astype(jnp.float32)
    xn = _layernorm(xf, ln1g, ln1b)
    q = xn @ wq + bq[0]
    k = xn @ wk + bk[0]
    v = xn @ wv + bv[0]
    qh = q.reshape(B, S, H, DH).transpose(0, 2, 1, 3)
    kh = k.reshape(B, S, H, DH).transpose(0, 2, 1, 3)
    vh = v.reshape(B, S, H, DH).transpose(0, 2, 1, 3)
    sc = jnp.einsum("bhqd,bhkd->bhqk", qh, kh) / math.sqrt(DH)
    p = jax.nn.softmax(sc, axis=-1)
    o = jnp.einsum("bhqk,bhkd->bhqd", p, vh).transpose(0, 2, 1, 3).reshape(B, S, D)
    x1 = xf + o @ wo + bo[0]
    xn2 = _layernorm(x1, ln2g, ln2b)
    hmid = jax.nn.gelu(xn2 @ w1 + b1[0], approximate=False)
    return x1 + hmid @ w2 + b2[0]


def make_params(key):
    ks = jax.random.split(key, 8)
    s = 0.1
    ln1g = jnp.ones((1, D), jnp.float32)
    ln1b = jnp.zeros((1, D), jnp.float32)
    wq = s * jax.random.normal(ks[0], (D, D), jnp.float32)
    wk = s * jax.random.normal(ks[1], (D, D), jnp.float32)
    wv = s * jax.random.normal(ks[2], (D, D), jnp.float32)
    bq = s * jax.random.normal(ks[3], (1, D), jnp.float32)
    bk = jnp.zeros((1, D), jnp.float32)
    bv = jnp.zeros((1, D), jnp.float32)
    wo = s * jax.random.normal(ks[4], (D, D), jnp.float32)
    bo = jnp.zeros((1, D), jnp.float32)
    ln2g = jnp.ones((1, D), jnp.float32)
    ln2b = jnp.zeros((1, D), jnp.float32)
    w1 = s * jax.random.normal(ks[5], (D, M), jnp.float32)
    b1 = s * jax.random.normal(ks[6], (1, M), jnp.float32)
    w2 = s * jax.random.normal(ks[7], (M, D), jnp.float32)
    b2 = jnp.zeros((1, D), jnp.float32)
    return (ln1g, ln1b, wq, wk, wv, bq, bk, bv, wo, bo,
            ln2g, ln2b, w1, b1, w2, b2)


if __name__ == "__main__":
    key = jax.random.PRNGKey(0)
    kx, kp = jax.random.split(key)
    x = jax.random.normal(kx, (B, S, D), jnp.float32)
    params = make_params(kp)

    out = transformer_encoder(x, params)
    out = jax.block_until_ready(out)

    ref = reference(x, params)
    assert out.shape == (B, S, D)
    assert jnp.allclose(out, ref, atol=1e-4, rtol=1e-4), \
        f"max err {jnp.max(jnp.abs(out - ref))}"
    print("KERNEL_OK")
</pallas_src>

<mosaic_0001>
module attributes {stable_mosaic.version = 11 : i64} {
  func.func @encoder_kernel(%arg0: memref<16x32xf32, #tpu.memory_space<vmem>>, %arg1: memref<1x32xf32, #tpu.memory_space<vmem>>, %arg2: memref<1x32xf32, #tpu.memory_space<vmem>>, %arg3: memref<32x96xf32, #tpu.memory_space<vmem>>, %arg4: memref<1x96xf32, #tpu.memory_space<vmem>>, %arg5: memref<32x32xf32, #tpu.memory_space<vmem>>, %arg6: memref<1x32xf32, #tpu.memory_space<vmem>>, %arg7: memref<1x32xf32, #tpu.memory_space<vmem>>, %arg8: memref<1x32xf32, #tpu.memory_space<vmem>>, %arg9: memref<32x64xf32, #tpu.memory_space<vmem>>, %arg10: memref<1x64xf32, #tpu.memory_space<vmem>>, %arg11: memref<64x32xf32, #tpu.memory_space<vmem>>, %arg12: memref<1x32xf32, #tpu.memory_space<vmem>>, %arg13: memref<16x32xf32, #tpu.memory_space<vmem>>) attributes {dimension_semantics = [], scalar_prefetch = 0 : i64, scratch_operands = 0 : i64, tpu.core_type = #tpu.core_type<tc>} {
    %c0 = arith.constant 0 : index
    %c0_0 = arith.constant 0 : index
    %0 = vector.load %arg0[%c0, %c0_0] : memref<16x32xf32, #tpu.memory_space<vmem>>, vector<16x32xf32>
    %c0_1 = arith.constant 0 : index
    %c0_2 = arith.constant 0 : index
    %1 = vector.load %arg1[%c0_1, %c0_2] : memref<1x32xf32, #tpu.memory_space<vmem>>, vector<1x32xf32>
    %c0_3 = arith.constant 0 : index
    %c0_4 = arith.constant 0 : index
    %2 = vector.load %arg2[%c0_3, %c0_4] : memref<1x32xf32, #tpu.memory_space<vmem>>, vector<1x32xf32>
    %cst = arith.constant dense<0.000000e+00> : vector<16xf32>
    %3 = vector.multi_reduction <add>, %0, %cst [1] : vector<16x32xf32> to vector<16xf32>
    %4 = vector.shape_cast %3 : vector<16xf32> to vector<16x1xf32>
    %cst_5 = arith.constant 3.200000e+01 : f32
    %5 = vector.broadcast %cst_5 : f32 to vector<16x1xf32>
    %6 = arith.divf %4, %5 : vector<16x1xf32>
    %7 = vector.broadcast %6 : vector<16x1xf32> to vector<16x32xf32>
    %8 = arith.subf %0, %7 : vector<16x32xf32>
    %9 = arith.mulf %8, %8 : vector<16x32xf32>
    %cst_6 = arith.constant dense<0.000000e+00> : vector<16xf32>
    %10 = vector.multi_reduction <add>, %9, %cst_6 [1] : vector<16x32xf32> to vector<16xf32>
    %11 = vector.shape_cast %10 : vector<16xf32> to vector<16x1xf32>
    %cst_7 = arith.constant 3.200000e+01 : f32
    %12 = vector.broadcast %cst_7 : f32 to vector<16x1xf32>
    %13 = arith.divf %11, %12 : vector<16x1xf32>
    %14 = vector.broadcast %6 : vector<16x1xf32> to vector<16x32xf32>
    %15 = arith.subf %0, %14 : vector<16x32xf32>
    %cst_8 = arith.constant 9.99999974E-6 : f32
    %16 = vector.broadcast %cst_8 : f32 to vector<16x1xf32>
    %17 = arith.addf %13, %16 : vector<16x1xf32>
    %18 = math.rsqrt %17 : vector<16x1xf32>
    %19 = vector.broadcast %18 : vector<16x1xf32> to vector<16x32xf32>
    %20 = arith.mulf %15, %19 : vector<16x32xf32>
    %21 = vector.broadcast %1 : vector<1x32xf32> to vector<16x32xf32>
    %22 = arith.mulf %20, %21 : vector<16x32xf32>
    %23 = vector.broadcast %2 : vector<1x32xf32> to vector<16x32xf32>
    %24 = arith.addf %22, %23 : vector<16x32xf32>
    %c0_9 = arith.constant 0 : index
    %c0_10 = arith.constant 0 : index
    %25 = vector.load %arg3[%c0_9, %c0_10] : memref<32x96xf32, #tpu.memory_space<vmem>>, vector<32x96xf32>
    %cst_11 = arith.constant dense<0.000000e+00> : vector<16x96xf32>
    %26 = tpu.matmul %24, %25, %cst_11 {dimension_numbers = #tpu.dot_dimension_numbers<[1], [0], [0], [1], [0, 0, 1, 1], [], []>} : vector<16x32xf32>, vector<32x96xf32>, vector<16x96xf32> -> vector<16x96xf32>
    %c0_12 = arith.constant 0 : index
    %c0_13 = arith.constant 0 : index
    %27 = vector.load %arg4[%c0_12, %c0_13] : memref<1x96xf32, #tpu.memory_space<vmem>>, vector<1x96xf32>
    %28 = vector.broadcast %27 : vector<1x96xf32> to vector<16x96xf32>
    %29 = arith.addf %26, %28 : vector<16x96xf32>
    %30 = vector.extract_strided_slice %29 {offsets = [0, 0], sizes = [16, 32], strides = [1, 1]} : vector<16x96xf32> to vector<16x32xf32>
    %31 = vector.extract_strided_slice %29 {offsets = [0, 32], sizes = [16, 32], strides = [1, 1]} : vector<16x96xf32> to vector<16x32xf32>
    %32 = vector.extract_strided_slice %29 {offsets = [0, 64], sizes = [16, 32], strides = [1, 1]} : vector<16x96xf32> to vector<16x32xf32>
    %33 = vector.extract_strided_slice %30 {offsets = [0, 0], sizes = [8, 8], strides = [1, 1]} : vector<16x32xf32> to vector<8x8xf32>
    %34 = vector.extract_strided_slice %30 {offsets = [0, 8], sizes = [8, 8], strides = [1, 1]} : vector<16x32xf32> to vector<8x8xf32>
    %35 = vector.extract_strided_slice %30 {offsets = [0, 16], sizes = [8, 8], strides = [1, 1]} : vector<16x32xf32> to vector<8x8xf32>
    %36 = vector.extract_strided_slice %30 {offsets = [0, 24], sizes = [8, 8], strides = [1, 1]} : vector<16x32xf32> to vector<8x8xf32>
    %37 = vector.extract_strided_slice %30 {offsets = [8, 0], sizes = [8, 8], strides = [1, 1]} : vector<16x32xf32> to vector<8x8xf32>
    %38 = vector.extract_strided_slice %30 {offsets = [8, 8], sizes = [8, 8], strides = [1, 1]} : vector<16x32xf32> to vector<8x8xf32>
    %39 = vector.extract_strided_slice %30 {offsets = [8, 16], sizes = [8, 8], strides = [1, 1]} : vector<16x32xf32> to vector<8x8xf32>
    %40 = vector.extract_strided_slice %30 {offsets = [8, 24], sizes = [8, 8], strides = [1, 1]} : vector<16x32xf32> to vector<8x8xf32>
    %41 = vector.shape_cast %33 : vector<8x8xf32> to vector<1x8x8xf32>
    %42 = vector.shape_cast %34 : vector<8x8xf32> to vector<1x8x8xf32>
    %43 = vector.shape_cast %35 : vector<8x8xf32> to vector<1x8x8xf32>
    %44 = vector.shape_cast %36 : vector<8x8xf32> to vector<1x8x8xf32>
    %45 = vector.shape_cast %37 : vector<8x8xf32> to vector<1x8x8xf32>
    %46 = vector.shape_cast %38 : vector<8x8xf32> to vector<1x8x8xf32>
    %47 = vector.shape_cast %39 : vector<8x8xf32> to vector<1x8x8xf32>
    %48 = vector.shape_cast %40 : vector<8x8xf32> to vector<1x8x8xf32>
    %49 = tpu.concatenate %41, %42, %43, %44, %45, %46, %47, %48 in 0 : vector<1x8x8xf32>, vector<1x8x8xf32>, vector<1x8x8xf32>, vector<1x8x8xf32>, vector<1x8x8xf32>, vector<1x8x8xf32>, vector<1x8x8xf32>, vector<1x8x8xf32> -> vector<8x8x8xf32>
    %50 = vector.extract_strided_slice %31 {offsets = [0, 0], sizes = [8, 8], strides = [1, 1]} : vector<16x32xf32> to vector<8x8xf32>
    %51 = vector.extract_strided_slice %31 {offsets = [0, 8], sizes = [8, 8], strides = [1, 1]} : vector<16x32xf32> to vector<8x8xf32>
    %52 = vector.extract_strided_slice %31 {offsets = [0, 16], sizes = [8, 8], strides = [1, 1]} : vector<16x32xf32> to vector<8x8xf32>
    %53 = vector.extract_strided_slice %31 {offsets = [0, 24], sizes = [8, 8], strides = [1, 1]} : vector<16x32xf32> to vector<8x8xf32>
    %54 = vector.extract_strided_slice %31 {offsets = [8, 0], sizes = [8, 8], strides = [1, 1]} : vector<16x32xf32> to vector<8x8xf32>
    %55 = vector.extract_strided_slice %31 {offsets = [8, 8], sizes = [8, 8], strides = [1, 1]} : vector<16x32xf32> to vector<8x8xf32>
    %56 = vector.extract_strided_slice %31 {offsets = [8, 16], sizes = [8, 8], strides = [1, 1]} : vector<16x32xf32> to vector<8x8xf32>
    %57 = vector.extract_strided_slice %31 {offsets = [8, 24], sizes = [8, 8], strides = [1, 1]} : vector<16x32xf32> to vector<8x8xf32>
    %58 = vector.shape_cast %50 : vector<8x8xf32> to vector<1x8x8xf32>
    %59 = vector.shape_cast %51 : vector<8x8xf32> to vector<1x8x8xf32>
    %60 = vector.shape_cast %52 : vector<8x8xf32> to vector<1x8x8xf32>
    %61 = vector.shape_cast %53 : vector<8x8xf32> to vector<1x8x8xf32>
    %62 = vector.shape_cast %54 : vector<8x8xf32> to vector<1x8x8xf32>
    %63 = vector.shape_cast %55 : vector<8x8xf32> to vector<1x8x8xf32>
    %64 = vector.shape_cast %56 : vector<8x8xf32> to vector<1x8x8xf32>
    %65 = vector.shape_cast %57 : vector<8x8xf32> to vector<1x8x8xf32>
    %66 = tpu.concatenate %58, %59, %60, %61, %62, %63, %64, %65 in 0 : vector<1x8x8xf32>, vector<1x8x8xf32>, vector<1x8x8xf32>, vector<1x8x8xf32>, vector<1x8x8xf32>, vector<1x8x8xf32>, vector<1x8x8xf32>, vector<1x8x8xf32> -> vector<8x8x8xf32>
    %67 = vector.extract_strided_slice %32 {offsets = [0, 0], sizes = [8, 8], strides = [1, 1]} : vector<16x32xf32> to vector<8x8xf32>
    %68 = vector.extract_strided_slice %32 {offsets = [0, 8], sizes = [8, 8], strides = [1, 1]} : vector<16x32xf32> to vector<8x8xf32>
    %69 = vector.extract_strided_slice %32 {offsets = [0, 16], sizes = [8, 8], strides = [1, 1]} : vector<16x32xf32> to vector<8x8xf32>
    %70 = vector.extract_strided_slice %32 {offsets = [0, 24], sizes = [8, 8], strides = [1, 1]} : vector<16x32xf32> to vector<8x8xf32>
    %71 = vector.extract_strided_slice %32 {offsets = [8, 0], sizes = [8, 8], strides = [1, 1]} : vector<16x32xf32> to vector<8x8xf32>
    %72 = vector.extract_strided_slice %32 {offsets = [8, 8], sizes = [8, 8], strides = [1, 1]} : vector<16x32xf32> to vector<8x8xf32>
    %73 = vector.extract_strided_slice %32 {offsets = [8, 16], sizes = [8, 8], strides = [1, 1]} : vector<16x32xf32> to vector<8x8xf32>
    %74 = vector.extract_strided_slice %32 {offsets = [8, 24], sizes = [8, 8], strides = [1, 1]} : vector<16x32xf32> to vector<8x8xf32>
    %75 = vector.shape_cast %67 : vector<8x8xf32> to vector<1x8x8xf32>
    %76 = vector.shape_cast %68 : vector<8x8xf32> to vector<1x8x8xf32>
    %77 = vector.shape_cast %69 : vector<8x8xf32> to vector<1x8x8xf32>
    %78 = vector.shape_cast %70 : vector<8x8xf32> to vector<1x8x8xf32>
    %79 = vector.shape_cast %71 : vector<8x8xf32> to vector<1x8x8xf32>
    %80 = vector.shape_cast %72 : vector<8x8xf32> to vector<1x8x8xf32>
    %81 = vector.shape_cast %73 : vector<8x8xf32> to vector<1x8x8xf32>
    %82 = vector.shape_cast %74 : vector<8x8xf32> to vector<1x8x8xf32>
    %83 = tpu.concatenate %75, %76, %77, %78, %79, %80, %81, %82 in 0 : vector<1x8x8xf32>, vector<1x8x8xf32>, vector<1x8x8xf32>, vector<1x8x8xf32>, vector<1x8x8xf32>, vector<1x8x8xf32>, vector<1x8x8xf32>, vector<1x8x8xf32> -> vector<8x8x8xf32>
    "tpu.trace_start"() <{level = 10 : i32, message = "nqd,nkd->nqk"}> : () -> ()
    %cst_14 = arith.constant dense<0.000000e+00> : vector<8x8x8xf32>
    %84 = tpu.matmul %49, %66, %cst_14 {dimension_numbers = #tpu.dot_dimension_numbers<[2], [2], [1], [1], [0, 0, 0, 1, 1, 1], [0], [0]>} : vector<8x8x8xf32>, vector<8x8x8xf32>, vector<8x8x8xf32> -> vector<8x8x8xf32>
    "tpu.trace_stop"() : () -> ()
    %cst_15 = arith.constant 0.353553385 : f32
    %85 = vector.broadcast %cst_15 : f32 to vector<8x8x8xf32>
    %86 = arith.mulf %84, %85 : vector<8x8x8xf32>
    %cst_16 = arith.constant dense<0xFF800000> : vector<8x8xf32>
    %87 = vector.multi_reduction <maximumf>, %86, %cst_16 [2] : vector<8x8x8xf32> to vector<8x8xf32>
    %88 = vector.shape_cast %87 : vector<8x8xf32> to vector<8x8x1xf32>
    %89 = vector.broadcast %88 : vector<8x8x1xf32> to vector<8x8x8xf32>
    %90 = arith.subf %86, %89 : vector<8x8x8xf32>
    %91 = math.exp %90 : vector<8x8x8xf32>
    %cst_17 = arith.constant dense<0.000000e+00> : vector<8x8xf32>
    %92 = vector.multi_reduction <add>, %91, %cst_17 [2] : vector<8x8x8xf32> to vector<8x8xf32>
    %93 = vector.shape_cast %92 : vector<8x8xf32> to vector<8x8x1xf32>
    %94 = tpu.reciprocal %93 : vector<8x8x1xf32> -> vector<8x8x1xf32>
    %95 = vector.broadcast %94 : vector<8x8x1xf32> to vector<8x8x8xf32>
    %96 = arith.mulf %91, %95 : vector<8x8x8xf32>
    "tpu.trace_start"() <{level = 10 : i32, message = "nqk,nkd->nqd"}> : () -> ()
    %cst_18 = arith.constant dense<0.000000e+00> : vector<8x8x8xf32>
    %97 = tpu.matmul %96, %83, %cst_18 {dimension_numbers = #tpu.dot_dimension_numbers<[2], [1], [1], [2], [0, 0, 0, 1, 1, 2], [0], [0]>} : vector<8x8x8xf32>, vector<8x8x8xf32>, vector<8x8x8xf32> -> vector<8x8x8xf32>
    "tpu.trace_stop"() : () -> ()
    %98 = vector.extract_strided_slice %97 {offsets = [0, 0, 0], sizes = [1, 8, 8], strides = [1, 1, 1]} : vector<8x8x8xf32> to vector<1x8x8xf32>
    %99 = vector.shape_cast %98 : vector<1x8x8xf32> to vector<8x8xf32>
    %100 = vector.extract_strided_slice %97 {offsets = [1, 0, 0], sizes = [1, 8, 8], strides = [1, 1, 1]} : vector<8x8x8xf32> to vector<1x8x8xf32>
    %101 = vector.shape_cast %100 : vector<1x8x8xf32> to vector<8x8xf32>
    %102 = vector.extract_strided_slice %97 {offsets = [2, 0, 0], sizes = [1, 8, 8], strides = [1, 1, 1]} : vector<8x8x8xf32> to vector<1x8x8xf32>
    %103 = vector.shape_cast %102 : vector<1x8x8xf32> to vector<8x8xf32>
    %104 = vector.extract_strided_slice %97 {offsets = [3, 0, 0], sizes = [1, 8, 8], strides = [1, 1, 1]} : vector<8x8x8xf32> to vector<1x8x8xf32>
    %105 = vector.shape_cast %104 : vector<1x8x8xf32> to vector<8x8xf32>
    %106 = tpu.concatenate %99, %101, %103, %105 in 1 : vector<8x8xf32>, vector<8x8xf32>, vector<8x8xf32>, vector<8x8xf32> -> vector<8x32xf32>
    %107 = vector.extract_strided_slice %97 {offsets = [4, 0, 0], sizes = [1, 8, 8], strides = [1, 1, 1]} : vector<8x8x8xf32> to vector<1x8x8xf32>
    %108 = vector.shape_cast %107 : vector<1x8x8xf32> to vector<8x8xf32>
    %109 = vector.extract_strided_slice %97 {offsets = [5, 0, 0], sizes = [1, 8, 8], strides = [1, 1, 1]} : vector<8x8x8xf32> to vector<1x8x8xf32>
    %110 = vector.shape_cast %109 : vector<1x8x8xf32> to vector<8x8xf32>
    %111 = vector.extract_strided_slice %97 {offsets = [6, 0, 0], sizes = [1, 8, 8], strides = [1, 1, 1]} : vector<8x8x8xf32> to vector<1x8x8xf32>
    %112 = vector.shape_cast %111 : vector<1x8x8xf32> to vector<8x8xf32>
    %113 = vector.extract_strided_slice %97 {offsets = [7, 0, 0], sizes = [1, 8, 8], strides = [1, 1, 1]} : vector<8x8x8xf32> to vector<1x8x8xf32>
    %114 = vector.shape_cast %113 : vector<1x8x8xf32> to vector<8x8xf32>
    %115 = tpu.concatenate %108, %110, %112, %114 in 1 : vector<8x8xf32>, vector<8x8xf32>, vector<8x8xf32>, vector<8x8xf32> -> vector<8x32xf32>
    %116 = tpu.concatenate %106, %115 in 0 : vector<8x32xf32>, vector<8x32xf32> -> vector<16x32xf32>
    %c0_19 = arith.constant 0 : index
    %c0_20 = arith.constant 0 : index
    %117 = vector.load %arg5[%c0_19, %c0_20] : memref<32x32xf32, #tpu.memory_space<vmem>>, vector<32x32xf32>
    %cst_21 = arith.constant dense<0.000000e+00> : vector<16x32xf32>
    %118 = tpu.matmul %116, %117, %cst_21 {dimension_numbers = #tpu.dot_dimension_numbers<[1], [0], [0], [1], [0, 0, 1, 1], [], []>} : vector<16x32xf32>, vector<32x32xf32>, vector<16x32xf32> -> vector<16x32xf32>
    %c0_22 = arith.constant 0 : index
    %c0_23 = arith.constant 0 : index
    %119 = vector.load %arg6[%c0_22, %c0_23] : memref<1x32xf32, #tpu.memory_space<vmem>>, vector<1x32xf32>
    %120 = vector.broadcast %119 : vector<1x32xf32> to vector<16x32xf32>
    %121 = arith.addf %118, %120 : vector<16x32xf32>
    %122 = arith.addf %0, %121 : vector<16x32xf32>
    %c0_24 = arith.constant 0 : index
    %c0_25 = arith.constant 0 : index
    %123 = vector.load %arg7[%c0_24, %c0_25] : memref<1x32xf32, #tpu.memory_space<vmem>>, vector<1x32xf32>
    %c0_26 = arith.constant 0 : index
    %c0_27 = arith.constant 0 : index
    %124 = vector.load %arg8[%c0_26, %c0_27] : memref<1x32xf32, #tpu.memory_space<vmem>>, vector<1x32xf32>
    %cst_28 = arith.constant dense<0.000000e+00> : vector<16xf32>
    %125 = vector.multi_reduction <add>, %122, %cst_28 [1] : vector<16x32xf32> to vector<16xf32>
    %126 = vector.shape_cast %125 : vector<16xf32> to vector<16x1xf32>
    %cst_29 = arith.constant 3.200000e+01 : f32
    %127 = vector.broadcast %cst_29 : f32 to vector<16x1xf32>
    %128 = arith.divf %126, %127 : vector<16x1xf32>
    %129 = vector.broadcast %128 : vector<16x1xf32> to vector<16x32xf32>
    %130 = arith.subf %122, %129 : vector<16x32xf32>
    %131 = arith.mulf %130, %130 : vector<16x32xf32>
    %cst_30 = arith.constant dense<0.000000e+00> : vector<16xf32>
    %132 = vector.multi_reduction <add>, %131, %cst_30 [1] : vector<16x32xf32> to vector<16xf32>
    %133 = vector.shape_cast %132 : vector<16xf32> to vector<16x1xf32>
    %cst_31 = arith.constant 3.200000e+01 : f32
    %134 = vector.broadcast %cst_31 : f32 to vector<16x1xf32>
    %135 = arith.divf %133, %134 : vector<16x1xf32>
    %136 = vector.broadcast %128 : vector<16x1xf32> to vector<16x32xf32>
    %137 = arith.subf %122, %136 : vector<16x32xf32>
    %cst_32 = arith.constant 9.99999974E-6 : f32
    %138 = vector.broadcast %cst_32 : f32 to vector<16x1xf32>
    %139 = arith.addf %135, %138 : vector<16x1xf32>
    %140 = math.rsqrt %139 : vector<16x1xf32>
    %141 = vector.broadcast %140 : vector<16x1xf32> to vector<16x32xf32>
    %142 = arith.mulf %137, %141 : vector<16x32xf32>
    %143 = vector.broadcast %123 : vector<1x32xf32> to vector<16x32xf32>
    %144 = arith.mulf %142, %143 : vector<16x32xf32>
    %145 = vector.broadcast %124 : vector<1x32xf32> to vector<16x32xf32>
    %146 = arith.addf %144, %145 : vector<16x32xf32>
    %c0_33 = arith.constant 0 : index
    %c0_34 = arith.constant 0 : index
    %147 = vector.load %arg9[%c0_33, %c0_34] : memref<32x64xf32, #tpu.memory_space<vmem>>, vector<32x64xf32>
    %cst_35 = arith.constant dense<0.000000e+00> : vector<16x64xf32>
    %148 = tpu.matmul %146, %147, %cst_35 {dimension_numbers = #tpu.dot_dimension_numbers<[1], [0], [0], [1], [0, 0, 1, 1], [], []>} : vector<16x32xf32>, vector<32x64xf32>, vector<16x64xf32> -> vector<16x64xf32>
    %c0_36 = arith.constant 0 : index
    %c0_37 = arith.constant 0 : index
    %149 = vector.load %arg10[%c0_36, %c0_37] : memref<1x64xf32, #tpu.memory_space<vmem>>, vector<1x64xf32>
    %150 = vector.broadcast %149 : vector<1x64xf32> to vector<16x64xf32>
    %151 = arith.addf %148, %150 : vector<16x64xf32>
    %cst_38 = arith.constant 5.000000e-01 : f32
    %152 = vector.broadcast %cst_38 : f32 to vector<16x64xf32>
    %153 = arith.mulf %152, %151 : vector<16x64xf32>
    %cst_39 = arith.constant 0.707106769 : f32
    %154 = vector.broadcast %cst_39 : f32 to vector<16x64xf32>
    %155 = arith.mulf %151, %154 : vector<16x64xf32>
    %156 = math.erf %155 : vector<16x64xf32>
    %cst_40 = arith.constant 1.000000e+00 : f32
    %157 = vector.broadcast %cst_40 : f32 to vector<16x64xf32>
    %158 = arith.addf %157, %156 : vector<16x64xf32>
    %159 = arith.mulf %153, %158 : vector<16x64xf32>
    %c0_41 = arith.constant 0 : index
    %c0_42 = arith.constant 0 : index
    %160 = vector.load %arg11[%c0_41, %c0_42] : memref<64x32xf32, #tpu.memory_space<vmem>>, vector<64x32xf32>
    %cst_43 = arith.constant dense<0.000000e+00> : vector<16x32xf32>
    %161 = tpu.matmul %159, %160, %cst_43 {dimension_numbers = #tpu.dot_dimension_numbers<[1], [0], [0], [1], [0, 0, 1, 1], [], []>} : vector<16x64xf32>, vector<64x32xf32>, vector<16x32xf32> -> vector<16x32xf32>
    %c0_44 = arith.constant 0 : index
    %c0_45 = arith.constant 0 : index
    %162 = vector.load %arg12[%c0_44, %c0_45] : memref<1x32xf32, #tpu.memory_space<vmem>>, vector<1x32xf32>
    %163 = vector.broadcast %162 : vector<1x32xf32> to vector<16x32xf32>
    %164 = arith.addf %161, %163 : vector<16x32xf32>
    %165 = arith.addf %122, %164 : vector<16x32xf32>
    %c0_46 = arith.constant 0 : index
    %c0_47 = arith.constant 0 : index
    %166 = vector.load %arg13[%c0_46, %c0_47] : memref<16x32xf32, #tpu.memory_space<vmem>>, vector<16x32xf32>
    tpu.vector_store %arg13[%c0_46, %c0_47], %165 {strides = array<i32>} : memref<16x32xf32, #tpu.memory_space<vmem>>, vector<16x32xf32>,
    return
  }
}

</mosaic_0001>

<llo_original>
// kernel: tpu_custom_call.1
$region0: #{tpu_custom_call.1}
  #allocation0 [shape = 'u32[]', space=smem, size = 0x4, offset = 0x4, fixed_abs, tag = 'smem constant byte address 0x4 - core index']
  #allocation1 [shape = 'u32[144,128]{1,0:T(1,128)}', space=vmem, size = 0x12000, scoped, tag = 'internal scratch']
  %s0 = inlined_call_operand.hbm [shape: f32[16,32], index: 0, kind: input, shape index: {}]
  %s1 = inlined_call_operand.vmem [shape: f32[1,32], index: 1, kind: input, shape index: {}]
  %s2 = inlined_call_operand.vmem [shape: f32[1,32], index: 2, kind: input, shape index: {}]
  %s3 = inlined_call_operand.vmem [shape: f32[32,96], index: 3, kind: input, shape index: {}]
  %s4 = inlined_call_operand.vmem [shape: f32[1,96], index: 4, kind: input, shape index: {}]
  %s5 = inlined_call_operand.vmem [shape: f32[32,32], index: 5, kind: input, shape index: {}]
  %s6 = inlined_call_operand.vmem [shape: f32[1,32], index: 6, kind: input, shape index: {}]
  %s7 = inlined_call_operand.vmem [shape: f32[1,32], index: 7, kind: input, shape index: {}]
  %s8 = inlined_call_operand.vmem [shape: f32[1,32], index: 8, kind: input, shape index: {}]
  %s9 = inlined_call_operand.vmem [shape: f32[32,64], index: 9, kind: input, shape index: {}]
  %s10 = inlined_call_operand.vmem [shape: f32[1,64], index: 10, kind: input, shape index: {}]
  %s11 = inlined_call_operand.vmem [shape: f32[64,32], index: 11, kind: input, shape index: {}]
  %s12 = inlined_call_operand.vmem [shape: f32[1,32], index: 12, kind: input, shape index: {}]
  %s13 = inlined_call_operand.hbm [shape: f32[16,32], index: 13, kind: output, shape index: {}]
  %s14 = sld [smem:[#allocation0]]
  $region66: #{tpu_custom_call.1} parent=0
    _
  %s16 = ssub.s32 1, %s14
  %s17 = scalar_select 0, %s16, %s14
  $region1: #{tpu_custom_call.1} parent=0
    #allocation2 [shape = 'u8[8192]{0}', space=vmem, size = 0x2000, scoped, tag = 'input window, operand 0, single buffered']
    #allocation3 [shape = 's32[1]{0}', space=sflag, size = 0x4, scoped, tag = 'scoped memory for tpu_custom_call.1']
    #allocation4 [shape = 's32[1]{0}', space=sflag, size = 0x4, scoped, tag = 'scoped memory for tpu_custom_call.1']
    #allocation5 [shape = 'u8[8192]{0}', space=vmem, size = 0x2000, scoped, tag = 'output window, operand 0, single buffered']
    %18 = vsyncpa [#allocation3], 0
    %19 = vsyncpa [#allocation4], 0
    // Predicated region
    $region2: #{tpu_custom_call.1} parent=1 // pred_check
      _
    $region3: #{tpu_custom_call.1} parent=1 // pred_check_branch
      %21 = sbr.rel (0) target = $region5
    $region4: #{tpu_custom_call.1} parent=1 // pred_region
      %s23 = ssub.s32 256, 256
      %24 = vsyncadd [#allocation3], %s23
      %s25 = sshll.u32 [#allocation2], 4
      %s26 = int_to_ptr.vmem [resolvable:$true] %s25
      %31 = dma.hbm_to_vmem [thread:$0]  %s0, 256, %s26, [#allocation3], 128, 128, 8
    $region5: #{tpu_custom_call.1} parent=1 // pred_fallthru
      _
    // Predicated region
    $region6: #{tpu_custom_call.1} parent=1 // pred_check
      _
    $region7: #{tpu_custom_call.1} parent=1 // pred_check_branch
      %33 = sbr.rel (0) target = $region9
    $region8: #{tpu_custom_call.1} parent=1 // pred_region
      _
    $region9: #{tpu_custom_call.1} parent=1 // pred_fallthru
      _
    // Predicated region
    $region10: #{tpu_custom_call.1} parent=1 // pred_check
      _
    $region11: #{tpu_custom_call.1} parent=1 // pred_check_branch
      %35 = sbr.rel (0) target = $region13
    $region12: #{tpu_custom_call.1} parent=1 // pred_region
      _
    $region13: #{tpu_custom_call.1} parent=1 // pred_fallthru
      _
    // Predicated region
    $region14: #{tpu_custom_call.1} parent=1 // pred_check
      _
    $region15: #{tpu_custom_call.1} parent=1 // pred_check_branch
      %37 = sbr.rel (0) target = $region17
    $region16: #{tpu_custom_call.1} parent=1 // pred_region
      _
    $region17: #{tpu_custom_call.1} parent=1 // pred_fallthru
      _
    // Predicated region
    $region18: #{tpu_custom_call.1} parent=1 // pred_check
      _
    $region19: #{tpu_custom_call.1} parent=1 // pred_check_branch
      %39 = sbr.rel (0) target = $region21
    $region20: #{tpu_custom_call.1} parent=1 // pred_region
      _
    $region21: #{tpu_custom_call.1} parent=1 // pred_fallthru
      _
    // Predicated region
    $region22: #{tpu_custom_call.1} parent=1 // pred_check
      _
    $region23: #{tpu_custom_call.1} parent=1 // pred_check_branch
      %41 = sbr.rel (0) target = $region25
    $region24: #{tpu_custom_call.1} parent=1 // pred_region
      _
    $region25: #{tpu_custom_call.1} parent=1 // pred_fallthru
      _
    // Predicated region
    $region26: #{tpu_custom_call.1} parent=1 // pred_check
      _
    $region27: #{tpu_custom_call.1} parent=1 // pred_check_branch
      %43 = sbr.rel (0) target = $region29
    $region28: #{tpu_custom_call.1} parent=1 // pred_region
      _
    $region29: #{tpu_custom_call.1} parent=1 // pred_fallthru
      _
    // Predicated region
    $region30: #{tpu_custom_call.1} parent=1 // pred_check
      _
    $region31: #{tpu_custom_call.1} parent=1 // pred_check_branch
      %45 = sbr.rel (0) target = $region33
    $region32: #{tpu_custom_call.1} parent=1 // pred_region
      _
    $region33: #{tpu_custom_call.1} parent=1 // pred_fallthru
      _
    // Predicated region
    $region34: #{tpu_custom_call.1} parent=1 // pred_check
      _
    $region35: #{tpu_custom_call.1} parent=1 // pred_check_branch
      %47 = sbr.rel (0) target = $region37
    $region36: #{tpu_custom_call.1} parent=1 // pred_region
      _
    $region37: #{tpu_custom_call.1} parent=1 // pred_fallthru
      _
    // Predicated region
    $region38: #{tpu_custom_call.1} parent=1 // pred_check
      _
    $region39: #{tpu_custom_call.1} parent=1 // pred_check_branch
      %49 = sbr.rel (0) target = $region41
    $region40: #{tpu_custom_call.1} parent=1 // pred_region
      _
    $region41: #{tpu_custom_call.1} parent=1 // pred_fallthru
      _
    // Predicated region
    $region42: #{tpu_custom_call.1} parent=1 // pred_check
      _
    $region43: #{tpu_custom_call.1} parent=1 // pred_check_branch
      %51 = sbr.rel (0) target = $region45
    $region44: #{tpu_custom_call.1} parent=1 // pred_region
      _
    $region45: #{tpu_custom_call.1} parent=1 // pred_fallthru
      _
    // Predicated region
    $region46: #{tpu_custom_call.1} parent=1 // pred_check
      _
    $region47: #{tpu_custom_call.1} parent=1 // pred_check_branch
      %53 = sbr.rel (0) target = $region49
    $region48: #{tpu_custom_call.1} parent=1 // pred_region
      _
    $region49: #{tpu_custom_call.1} parent=1 // pred_fallthru
      _
    // Predicated region
    $region50: #{tpu_custom_call.1} parent=1 // pred_check
      _
    $region51: #{tpu_custom_call.1} parent=1 // pred_check_branch
      %55 = sbr.rel (0) target = $region53
    $region52: #{tpu_custom_call.1} parent=1 // pred_region
      _
    $region53: #{tpu_custom_call.1} parent=1 // pred_fallthru
      _
    // Predicated region
    $region54: #{tpu_custom_call.1} parent=1 // pred_check
      _
    $region55: #{tpu_custom_call.1} parent=1 // pred_check_branch
      %57 = sbr.rel (0) target = $region57
    $region56: #{tpu_custom_call.1} parent=1 // pred_region
      %58 = dma.done [#allocation3], 256
    $region57: #{tpu_custom_call.1} parent=1 // pred_fallthru
      _
    %v59 = vld [vmem:[#allocation2] sm:$0xff]
    %v60 = vld [vmem:[#allocation2 + $0x8] sm:$0xff]
    %v61 = vld [vmem:[%s1] sm:$0x1]
    %v62 = vld [vmem:[%s2] sm:$0x1]
    %vm63 = vcmask 261120
    %v64 = vsel %vm63, %v59, 0.0
    %65 = vadd.xlane.f32.xlu0 %v64
    %v66 = vpop.xlane.xlu0 %65
    %v67 = vsel %vm63, %v60, 0.0
    %68 = vadd.xlane.f32.xlu0 %v67
    %v69 = vpop.xlane.xlu0 %68
    %v70 = vrcp.pop 32.0
    %v71 = vmul.f32 %v66, %v70
    %v72 = vmul.f32 %v69, %v70
    %v73 = vsub.f32 %v59, %v71
    %v74 = vsub.f32 %v60, %v72
    %v75 = vmul.f32 %v73, %v73
    %v76 = vmul.f32 %v74, %v74
    %v77 = vsel %vm63, %v75, 0.0
    %78 = vadd.xlane.f32.xlu0 %v77
    %v79 = vpop.xlane.xlu0 %78
    %v80 = vsel %vm63, %v76, 0.0
    %81 = vadd.xlane.f32.xlu0 %v80
    %v82 = vpop.xlane.xlu0 %81
    %v83 = vmul.f32 %v79, %v70
    %v84 = vmul.f32 %v82, %v70
    %v85 = vadd.f32 %v83, 1e-05
    %v86 = vadd.f32 %v84, 1e-05
    %v87 = vrsqrt.pop %v85
    %v88 = vrsqrt.pop %v86
    %v89 = vmul.f32 %v73, %v87
    %v90 = vmul.f32 %v74, %v88
    %v92 = vlaneseq
    %v93 = vshrl.u32 %v92, 7
    %v94 = vsub.s32 0, %v93
    %v95 = vrot.slane %v61, %v94
    %v97 = vmul.f32 %v89, %v95
    %v98 = vmul.f32 %v90, %v95
    %v100 = vlaneseq
    %v101 = vshrl.u32 %v100, 7
    %v102 = vsub.s32 0, %v101
    %v103 = vrot.slane %v62, %v102
    %v105 = vadd.f32 %v97, %v103
    %v106 = vadd.f32 %v98, %v103
    %v107 = vld [vmem:[%s3] sm:$0xff]
    %v108 = vld [vmem:[%s3 + $0x8] sm:$0xff]
    %v109 = vld [vmem:[%s3 + $0x10] sm:$0xff]
    %v110 = vld [vmem:[%s3 + $0x18] sm:$0xff]
    %v111 = vld [vmem:[%s4] sm:$0x1]
    %v113 = vlaneseq
    %v114 = vshrl.u32 %v113, 7
    %v115 = vsub.s32 0, %v114
    %v116 = vrot.slane %v111, %v115
    %v119 = vsel %vm63, %v105, 0
    %v122 = vsel %vm63, %v106, 0
    %124 = vmatprep.subr.mxu0 0.0
    %125 = vmatpush1.msra.mxu0 %v107
    %126 = vmatprep.subr.mxu0 0.0
    %127 = vmatpush1.msra.mxu0 %v108
    %128 = vmatprep.subr.mxu0 0.0
    %129 = vmatpush1.msra.mxu0 %v109
    %130 = vmatprep.subr.mxu0 0.0
    %131 = vmatpush1.msra.mxu0 %v110
    %132 = vmatprep.subr.mxu0 0.0
    %133 = vmatpush1.msra.mxu0 0.0
    %134 = vmatprep.subr.mxu0 0.0
    %135 = vmatpush1.msra.mxu0 0.0
    %136 = vmatprep.subr.mxu0 0.0
    %137 = vmatpush1.msra.mxu0 0.0
    %138 = vmatprep.subr.mxu0 0.0
    %139 = vmatpush1.msra.mxu0 0.0
    %140 = vmatprep.subr.mxu0 0.0
    %141 = vmatpush1.msra.mxu0 0.0
    %142 = vmatprep.subr.mxu0 0.0
    %143 = vmatpush1.msra.mxu0 0.0
    %144 = vmatprep.subr.mxu0 0.0
    %145 = vmatpush1.msra.mxu0 0.0
    %146 = vmatprep.subr.mxu0 0.0
    %147 = vmatpush1.msra.mxu0 0.0
    %148 = vmatprep.subr.mxu0 0.0
    %149 = vmatpush1.msra.mxu0 0.0
    %150 = vmatprep.subr.mxu0 0.0
    %151 = vmatpush1.msra.mxu0 0.0
    %152 = vmatprep.subr.mxu0 0.0
    %153 = vmatpush1.msra.mxu0 0.0
    %154 = vmatprep.subr.mxu0 0.0
    %155 = vmatpush1.msra.mxu0 0.0
    %156 = vmatprep.subr.mxu0 0.0
    %157 = vmatpush1.msra.mxu0 0.0
    %158 = vmatprep.subr.mxu0 0.0
    %159 = vmatpush1.msra.mxu0 0.0
    %160 = vmatprep.subr.mxu0 0.0
    %161 = vmatpush1.msra.mxu0 0.0
    %162 = vmatprep.subr.mxu0 0.0
    %163 = vmatpush1.msra.mxu0 0.0
    %164 = vmatprep.subr.mxu0 0.0
    %165 = vmatpush1.msra.mxu0 0.0
    %166 = vmatprep.subr.mxu0 0.0
    %167 = vmatpush1.msra.mxu0 0.0
    %168 = vmatprep.subr.mxu0 0.0
    %169 = vmatpush1.msra.mxu0 0.0
    %170 = vmatprep.subr.mxu0 0.0
    %171 = vmatpush1.msra.mxu0 0.0
    %172 = vmatprep.subr.mxu0 0.0
    %173 = vmatpush1.msra.mxu0 0.0
    %174 = vmatprep.subr.mxu0 0.0
    %175 = vmatpush1.msra.mxu0 0.0
    %176 = vmatprep.subr.mxu0 0.0
    %177 = vmatpush1.msra.mxu0 0.0
    %178 = vmatprep.subr.mxu0 0.0
    %179 = vmatpush1.msra.mxu0 0.0
    %180 = vmatprep.subr.mxu0 0.0
    %181 = vmatpush1.msra.mxu0 0.0
    %182 = vmatprep.subr.mxu0 0.0
    %183 = vmatpush1.msra.mxu0 0.0
    %184 = vmatprep.subr.mxu0 0.0
    %185 = vmatpush1.msra.mxu0 0.0
    %186 = vmatprep.subr.mxu0 0.0
    %187 = vmatpush1.msra.mxu0 0.0
    %188 = vmatprep.mubr.f32.mxu0 0.0
    %189 = vmatmul.mubr.f32.gmra.mrb[0].mxu0 %v119
    %v190 = vpop.f32.mrb[0].mxu0
    %v191 = vadd.f32 %v116, %v190
    %v192 = vpop.f32.mrb[0].mxu0
    %193 = vmatprep.mubr.f32.mxu0 0.0
    %194 = vmatmul.mubr.f32.gmra.mrb[0].mxu0 %v122
    %v195 = vpop.f32.mrb[0].mxu0
    %v196 = vadd.f32 %v116, %v195
    %v197 = vpop.f32.mrb[0].mxu0
    %198 = vdwg.mxu0
    %200 = vrot.lane.b32.xlu0 %v191, 120
    %v201 = vpop.permute.xlu0 %200
    %202 = vrot.lane.b32.xlu0 %v191, 112
    %v203 = vpop.permute.xlu0 %202
    %204 = vrot.lane.b32.xlu0 %v191, 104
    %v205 = vpop.permute.xlu0 %204
    %207 = vrot.lane.b32.xlu0 %v196, 120
    %v208 = vpop.permute.xlu0 %207
    %209 = vrot.lane.b32.xlu0 %v196, 112
    %v210 = vpop.permute.xlu0 %209
    %211 = vrot.lane.b32.xlu0 %v196, 104
    %v212 = vpop.permute.xlu0 %211
    %213 = vrot.lane.b32.xlu0 %v191, 96
    %v214 = vpop.permute.xlu0 %213
    %vm215 = vcmask 64512
    %v216 = vsel %vm215, %v191, 0
    %v218 = vsel %vm215, %v214, 0
    %220 = vmatprep.subr.mxu0 0.0
    %221 = vmatpush1.xpose.msra.mxu0 %v218
    %222 = vmatprep.subr.mxu0 0.0
    %223 = vmatpush1.xpose.msra.mxu0 0.0
    %224 = vmatprep.subr.mxu0 0.0
    %225 = vmatpush1.xpose.msra.mxu0 0.0
    %226 = vmatprep.subr.mxu0 0.0
    %227 = vmatpush1.xpose.msra.mxu0 0.0
    %228 = vmatprep.subr.mxu0 0.0
    %229 = vmatpush1.xpose.msra.mxu0 0.0
    %230 = vmatprep.subr.mxu0 0.0
    %231 = vmatpush1.xpose.msra.mxu0 0.0
    %232 = vmatprep.subr.mxu0 0.0
    %233 = vmatpush1.xpose.msra.mxu0 0.0
    %234 = vmatprep.subr.mxu0 0.0
    %235 = vmatpush1.xpose.msra.mxu0 0.0
    %236 = vmatprep.subr.mxu0 0.0
    %237 = vmatpush1.xpose.msra.mxu0 0.0
    %238 = vmatprep.subr.mxu0 0.0
    %239 = vmatpush1.xpose.msra.mxu0 0.0
    %240 = vmatprep.subr.mxu0 0.0
    %241 = vmatpush1.xpose.msra.mxu0 0.0
    %242 = vmatprep.subr.mxu0 0.0
    %243 = vmatpush1.xpose.msra.mxu0 0.0
    %244 = vmatprep.subr.mxu0 0.0
    %245 = vmatpush1.xpose.msra.mxu0 0.0
    %246 = vmatprep.subr.mxu0 0.0
    %247 = vmatpush1.xpose.msra.mxu0 0.0
    %248 = vmatprep.subr.mxu0 0.0
    %249 = vmatpush1.xpose.msra.mxu0 0.0
    %250 = vmatprep.subr.mxu0 0.0
    %251 = vmatpush1.xpose.msra.mxu0 0.0
    %252 = vmatprep.subr.mxu0 0.0
    %253 = vmatpush1.xpose.msra.mxu0 0.0
    %254 = vmatprep.subr.mxu0 0.0
    %255 = vmatpush1.xpose.msra.mxu0 0.0
    %256 = vmatprep.subr.mxu0 0.0
    %257 = vmatpush1.xpose.msra.mxu0 0.0
    %258 = vmatprep.subr.mxu0 0.0
    %259 = vmatpush1.xpose.msra.mxu0 0.0
    %260 = vmatprep.subr.mxu0 0.0
    %261 = vmatpush1.xpose.msra.mxu0 0.0
    %262 = vmatprep.subr.mxu0 0.0
    %263 = vmatpush1.xpose.msra.mxu0 0.0
    %264 = vmatprep.subr.mxu0 0.0
    %265 = vmatpush1.xpose.msra.mxu0 0.0
    %266 = vmatprep.subr.mxu0 0.0
    %267 = vmatpush1.xpose.msra.mxu0 0.0
    %268 = vmatprep.subr.mxu0 0.0
    %269 = vmatpush1.xpose.msra.mxu0 0.0
    %270 = vmatprep.subr.mxu0 0.0
    %271 = vmatpush1.xpose.msra.mxu0 0.0
    %272 = vmatprep.subr.mxu0 0.0
    %273 = vmatpush1.xpose.msra.mxu0 0.0
    %274 = vmatprep.subr.mxu0 0.0
    %275 = vmatpush1.xpose.msra.mxu0 0.0
    %276 = vmatprep.subr.mxu0 0.0
    %277 = vmatpush1.xpose.msra.mxu0 0.0
    %278 = vmatprep.subr.mxu0 0.0
    %279 = vmatpush1.xpose.msra.mxu0 0.0
    %280 = vmatprep.subr.mxu0 0.0
    %281 = vmatpush1.xpose.msra.mxu0 0.0
    %282 = vmatprep.subr.mxu0 0.0
    %283 = vmatpush1.xpose.msra.mxu0 0.0
    %284 = vmatprep.mubr.f32.mxu0 0.0
    %285 = vmatmul.mubr.f32.gmra.mrb[0].mxu0 %v216
    %v286 = vpop.f32.mrb[0].mxu0
    %v287 = vadd.f32 0.0, %v286
    %v288 = vpop.f32.mrb[0].mxu0
    %289 = vdwg.mxu0
    %290 = vrot.lane.b32.xlu0 %v201, 96
    %v291 = vpop.permute.xlu0 %290
    %v292 = vsel %vm215, %v201, 0
    %v294 = vsel %vm215, %v291, 0
    %296 = vmatprep.subr.mxu0 0.0
    %297 = vmatpush1.xpose.msra.mxu0 %v294
    %298 = vmatprep.subr.mxu0 0.0
    %299 = vmatpush1.xpose.msra.mxu0 0.0
    %300 = vmatprep.subr.mxu0 0.0
    %301 = vmatpush1.xpose.msra.mxu0 0.0
    %302 = vmatprep.subr.mxu0 0.0
    %303 = vmatpush1.xpose.msra.mxu0 0.0
    %304 = vmatprep.subr.mxu0 0.0
    %305 = vmatpush1.xpose.msra.mxu0 0.0
    %306 = vmatprep.subr.mxu0 0.0
    %307 = vmatpush1.xpose.msra.mxu0 0.0
    %308 = vmatprep.subr.mxu0 0.0
    %309 = vmatpush1.xpose.msra.mxu0 0.0
    %310 = vmatprep.subr.mxu0 0.0
    %311 = vmatpush1.xpose.msra.mxu0 0.0
    %312 = vmatprep.subr.mxu0 0.0
    %313 = vmatpush1.xpose.msra.mxu0 0.0
    %314 = vmatprep.subr.mxu0 0.0
    %315 = vmatpush1.xpose.msra.mxu0 0.0
    %316 = vmatprep.subr.mxu0 0.0
    %317 = vmatpush1.xpose.msra.mxu0 0.0
    %318 = vmatprep.subr.mxu0 0.0
    %319 = vmatpush1.xpose.msra.mxu0 0.0
    %320 = vmatprep.subr.mxu0 0.0
    %321 = vmatpush1.xpose.msra.mxu0 0.0
    %322 = vmatprep.subr.mxu0 0.0
    %323 = vmatpush1.xpose.msra.mxu0 0.0
    %324 = vmatprep.subr.mxu0 0.0
    %325 = vmatpush1.xpose.msra.mxu0 0.0
    %326 = vmatprep.subr.mxu0 0.0
    %327 = vmatpush1.xpose.msra.mxu0 0.0
    %328 = vmatprep.subr.mxu0 0.0
    %329 = vmatpush1.xpose.msra.mxu0 0.0
    %330 = vmatprep.subr.mxu0 0.0
    %331 = vmatpush1.xpose.msra.mxu0 0.0
    %332 = vmatprep.subr.mxu0 0.0
    %333 = vmatpush1.xpose.msra.mxu0 0.0
    %334 = vmatprep.subr.mxu0 0.0
    %335 = vmatpush1.xpose.msra.mxu0 0.0
    %336 = vmatprep.subr.mxu0 0.0
    %337 = vmatpush1.xpose.msra.mxu0 0.0
    %338 = vmatprep.subr.mxu0 0.0
    %339 = vmatpush1.xpose.msra.mxu0 0.0
    %340 = vmatprep.subr.mxu0 0.0
    %341 = vmatpush1.xpose.msra.mxu0 0.0
    %342 = vmatprep.subr.mxu0 0.0
    %343 = vmatpush1.xpose.msra.mxu0 0.0
    %344 = vmatprep.subr.mxu0 0.0
    %345 = vmatpush1.xpose.msra.mxu0 0.0
    %346 = vmatprep.subr.mxu0 0.0
    %347 = vmatpush1.xpose.msra.mxu0 0.0
    %348 = vmatprep.subr.mxu0 0.0
    %349 = vmatpush1.xpose.msra.mxu0 0.0
    %350 = vmatprep.subr.mxu0 0.0
    %351 = vmatpush1.xpose.msra.mxu0 0.0
    %352 = vmatprep.subr.mxu0 0.0
    %353 = vmatpush1.xpose.msra.mxu0 0.0
    %354 = vmatprep.subr.mxu0 0.0
    %355 = vmatpush1.xpose.msra.mxu0 0.0
    %356 = vmatprep.subr.mxu0 0.0
    %357 = vmatpush1.xpose.msra.mxu0 0.0
    %358 = vmatprep.subr.mxu0 0.0
    %359 = vmatpush1.xpose.msra.mxu0 0.0
    %360 = vmatprep.mubr.f32.mxu0 0.0
    %361 = vmatmul.mubr.f32.gmra.mrb[0].mxu0 %v292
    %v362 = vpop.f32.mrb[0].mxu0
    %v363 = vadd.f32 0.0, %v362
    %v364 = vpop.f32.mrb[0].mxu0
    %365 = vdwg.mxu0
    %366 = vrot.lane.b32.xlu0 %v203, 96
    %v367 = vpop.permute.xlu0 %366
    %v368 = vsel %vm215, %v203, 0
    %v370 = vsel %vm215, %v367, 0
    %372 = vmatprep.subr.mxu0 0.0
    %373 = vmatpush1.xpose.msra.mxu0 %v370
    %374 = vmatprep.subr.mxu0 0.0
    %375 = vmatpush1.xpose.msra.mxu0 0.0
    %376 = vmatprep.subr.mxu0 0.0
    %377 = vmatpush1.xpose.msra.mxu0 0.0
    %378 = vmatprep.subr.mxu0 0.0
    %379 = vmatpush1.xpose.msra.mxu0 0.0
    %380 = vmatprep.subr.mxu0 0.0
    %381 = vmatpush1.xpose.msra.mxu0 0.0
    %382 = vmatprep.subr.mxu0 0.0
    %383 = vmatpush1.xpose.msra.mxu0 0.0
    %384 = vmatprep.subr.mxu0 0.0
    %385 = vmatpush1.xpose.msra.mxu0 0.0
    %386 = vmatprep.subr.mxu0 0.0
    %387 = vmatpush1.xpose.msra.mxu0 0.0
    %388 = vmatprep.subr.mxu0 0.0
    %389 = vmatpush1.xpose.msra.mxu0 0.0
    %390 = vmatprep.subr.mxu0 0.0
    %391 = vmatpush1.xpose.msra.mxu0 0.0
    %392 = vmatprep.subr.mxu0 0.0
    %393 = vmatpush1.xpose.msra.mxu0 0.0
    %394 = vmatprep.subr.mxu0 0.0
    %395 = vmatpush1.xpose.msra.mxu0 0.0
    %396 = vmatprep.subr.mxu0 0.0
    %397 = vmatpush1.xpose.msra.mxu0 0.0
    %398 = vmatprep.subr.mxu0 0.0
    %399 = vmatpush1.xpose.msra.mxu0 0.0
    %400 = vmatprep.subr.mxu0 0.0
    %401 = vmatpush1.xpose.msra.mxu0 0.0
    %402 = vmatprep.subr.mxu0 0.0
    %403 = vmatpush1.xpose.msra.mxu0 0.0
    %404 = vmatprep.subr.mxu0 0.0
    %405 = vmatpush1.xpose.msra.mxu0 0.0
    %406 = vmatprep.subr.mxu0 0.0
    %407 = vmatpush1.xpose.msra.mxu0 0.0
    %408 = vmatprep.subr.mxu0 0.0
    %409 = vmatpush1.xpose.msra.mxu0 0.0
    %410 = vmatprep.subr.mxu0 0.0
    %411 = vmatpush1.xpose.msra.mxu0 0.0
    %412 = vmatprep.subr.mxu0 0.0
    %413 = vmatpush1.xpose.msra.mxu0 0.0
    %414 = vmatprep.subr.mxu0 0.0
    %415 = vmatpush1.xpose.msra.mxu0 0.0
    %416 = vmatprep.subr.mxu0 0.0
    %417 = vmatpush1.xpose.msra.mxu0 0.0
    %418 = vmatprep.subr.mxu0 0.0
    %419 = vmatpush1.xpose.msra.mxu0 0.0
    %420 = vmatprep.subr.mxu0 0.0
    %421 = vmatpush1.xpose.msra.mxu0 0.0
    %422 = vmatprep.subr.mxu0 0.0
    %423 = vmatpush1.xpose.msra.mxu0 0.0
    %424 = vmatprep.subr.mxu0 0.0
    %425 = vmatpush1.xpose.msra.mxu0 0.0
    %426 = vmatprep.subr.mxu0 0.0
    %427 = vmatpush1.xpose.msra.mxu0 0.0
    %428 = vmatprep.subr.mxu0 0.0
    %429 = vmatpush1.xpose.msra.mxu0 0.0
    %430 = vmatprep.subr.mxu0 0.0
    %431 = vmatpush1.xpose.msra.mxu0 0.0
    %432 = vmatprep.subr.mxu0 0.0
    %433 = vmatpush1.xpose.msra.mxu0 0.0
    %434 = vmatprep.subr.mxu0 0.0
    %435 = vmatpush1.xpose.msra.mxu0 0.0
    %436 = vmatprep.mubr.f32.mxu0 0.0
    %437 = vmatmul.mubr.f32.gmra.mrb[0].mxu0 %v368
    %v438 = vpop.f32.mrb[0].mxu0
    %v439 = vadd.f32 0.0, %v438
    %v440 = vpop.f32.mrb[0].mxu0
    %441 = vdwg.mxu0
    %442 = vrot.lane.b32.xlu0 %v205, 96
    %v443 = vpop.permute.xlu0 %442
    %v444 = vsel %vm215, %v205, 0
    %v446 = vsel %vm215, %v443, 0
    %448 = vmatprep.subr.mxu0 0.0
    %449 = vmatpush1.xpose.msra.mxu0 %v446
    %450 = vmatprep.subr.mxu0 0.0
    %451 = vmatpush1.xpose.msra.mxu0 0.0
    %452 = vmatprep.subr.mxu0 0.0
    %453 = vmatpush1.xpose.msra.mxu0 0.0
    %454 = vmatprep.subr.mxu0 0.0
    %455 = vmatpush1.xpose.msra.mxu0 0.0
    %456 = vmatprep.subr.mxu0 0.0
    %457 = vmatpush1.xpose.msra.mxu0 0.0
    %458 = vmatprep.subr.mxu0 0.0
    %459 = vmatpush1.xpose.msra.mxu0 0.0
    %460 = vmatprep.subr.mxu0 0.0
    %461 = vmatpush1.xpose.msra.mxu0 0.0
    %462 = vmatprep.subr.mxu0 0.0
    %463 = vmatpush1.xpose.msra.mxu0 0.0
    %464 = vmatprep.subr.mxu0 0.0
    %465 = vmatpush1.xpose.msra.mxu0 0.0
    %466 = vmatprep.subr.mxu0 0.0
    %467 = vmatpush1.xpose.msra.mxu0 0.0
    %468 = vmatprep.subr.mxu0 0.0
    %469 = vmatpush1.xpose.msra.mxu0 0.0
    %470 = vmatprep.subr.mxu0 0.0
    %471 = vmatpush1.xpose.msra.mxu0 0.0
    %472 = vmatprep.subr.mxu0 0.0
    %473 = vmatpush1.xpose.msra.mxu0 0.0
    %474 = vmatprep.subr.mxu0 0.0
    %475 = vmatpush1.xpose.msra.mxu0 0.0
    %476 = vmatprep.subr.mxu0 0.0
    %477 = vmatpush1.xpose.msra.mxu0 0.0
    %478 = vmatprep.subr.mxu0 0.0
    %479 = vmatpush1.xpose.msra.mxu0 0.0
    %480 = vmatprep.subr.mxu0 0.0
    %481 = vmatpush1.xpose.msra.mxu0 0.0
    %482 = vmatprep.subr.mxu0 0.0
    %483 = vmatpush1.xpose.msra.mxu0 0.0
    %484 = vmatprep.subr.mxu0 0.0
    %485 = vmatpush1.xpose.msra.mxu0 0.0
    %486 = vmatprep.subr.mxu0 0.0
    %487 = vmatpush1.xpose.msra.mxu0 0.0
    %488 = vmatprep.subr.mxu0 0.0
    %489 = vmatpush1.xpose.msra.mxu0 0.0
    %490 = vmatprep.subr.mxu0 0.0
    %491 = vmatpush1.xpose.msra.mxu0 0.0
    %492 = vmatprep.subr.mxu0 0.0
    %493 = vmatpush1.xpose.msra.mxu0 0.0
    %494 = vmatprep.subr.mxu0 0.0
    %495 = vmatpush1.xpose.msra.mxu0 0.0
    %496 = vmatprep.subr.mxu0 0.0
    %497 = vmatpush1.xpose.msra.mxu0 0.0
    %498 = vmatprep.subr.mxu0 0.0
    %499 = vmatpush1.xpose.msra.mxu0 0.0
    %500 = vmatprep.subr.mxu0 0.0
    %501 = vmatpush1.xpose.msra.mxu0 0.0
    %502 = vmatprep.subr.mxu0 0.0
    %503 = vmatpush1.xpose.msra.mxu0 0.0
    %504 = vmatprep.subr.mxu0 0.0
    %505 = vmatpush1.xpose.msra.mxu0 0.0
    %506 = vmatprep.subr.mxu0 0.0
    %507 = vmatpush1.xpose.msra.mxu0 0.0
    %508 = vmatprep.subr.mxu0 0.0
    %509 = vmatpush1.xpose.msra.mxu0 0.0
    %510 = vmatprep.subr.mxu0 0.0
    %511 = vmatpush1.xpose.msra.mxu0 0.0
    %512 = vmatprep.mubr.f32.mxu0 0.0
    %513 = vmatmul.mubr.f32.gmra.mrb[0].mxu0 %v444
    %v514 = vpop.f32.mrb[0].mxu0
    %v515 = vadd.f32 0.0, %v514
    %v516 = vpop.f32.mrb[0].mxu0
    %517 = vdwg.mxu0
    %518 = vrot.lane.b32.xlu0 %v196, 96
    %v519 = vpop.permute.xlu0 %518
    %v520 = vsel %vm215, %v196, 0
    %v522 = vsel %vm215, %v519, 0
    %524 = vmatprep.subr.mxu0 0.0
    %525 = vmatpush1.xpose.msra.mxu0 %v522
    %526 = vmatprep.subr.mxu0 0.0
    %527 = vmatpush1.xpose.msra.mxu0 0.0
    %528 = vmatprep.subr.mxu0 0.0
    %529 = vmatpush1.xpose.msra.mxu0 0.0
    %530 = vmatprep.subr.mxu0 0.0
    %531 = vmatpush1.xpose.msra.mxu0 0.0
    %532 = vmatprep.subr.mxu0 0.0
    %533 = vmatpush1.xpose.msra.mxu0 0.0
    %534 = vmatprep.subr.mxu0 0.0
    %535 = vmatpush1.xpose.msra.mxu0 0.0
    %536 = vmatprep.subr.mxu0 0.0
    %537 = vmatpush1.xpose.msra.mxu0 0.0
    %538 = vmatprep.subr.mxu0 0.0
    %539 = vmatpush1.xpose.msra.mxu0 0.0
    %540 = vmatprep.subr.mxu0 0.0
    %541 = vmatpush1.xpose.msra.mxu0 0.0
    %542 = vmatprep.subr.mxu0 0.0
    %543 = vmatpush1.xpose.msra.mxu0 0.0
    %544 = vmatprep.subr.mxu0 0.0
    %545 = vmatpush1.xpose.msra.mxu0 0.0
    %546 = vmatprep.subr.mxu0 0.0
    %547 = vmatpush1.xpose.msra.mxu0 0.0
    %548 = vmatprep.subr.mxu0 0.0
    %549 = vmatpush1.xpose.msra.mxu0 0.0
    %550 = vmatprep.subr.mxu0 0.0
    %551 = vmatpush1.xpose.msra.mxu0 0.0
    %552 = vmatprep.subr.mxu0 0.0
    %553 = vmatpush1.xpose.msra.mxu0 0.0
    %554 = vmatprep.subr.mxu0 0.0
    %555 = vmatpush1.xpose.msra.mxu0 0.0
    %556 = vmatprep.subr.mxu0 0.0
    %557 = vmatpush1.xpose.msra.mxu0 0.0
    %558 = vmatprep.subr.mxu0 0.0
    %559 = vmatpush1.xpose.msra.mxu0 0.0
    %560 = vmatprep.subr.mxu0 0.0
    %561 = vmatpush1.xpose.msra.mxu0 0.0
    %562 = vmatprep.subr.mxu0 0.0
    %563 = vmatpush1.xpose.msra.mxu0 0.0
    %564 = vmatprep.subr.mxu0 0.0
    %565 = vmatpush1.xpose.msra.mxu0 0.0
    %566 = vmatprep.subr.mxu0 0.0
    %567 = vmatpush1.xpose.msra.mxu0 0.0
    %568 = vmatprep.subr.mxu0 0.0
    %569 = vmatpush1.xpose.msra.mxu0 0.0
    %570 = vmatprep.subr.mxu0 0.0
    %571 = vmatpush1.xpose.msra.mxu0 0.0
    %572 = vmatprep.subr.mxu0 0.0
    %573 = vmatpush1.xpose.msra.mxu0 0.0
    %574 = vmatprep.subr.mxu0 0.0
    %575 = vmatpush1.xpose.msra.mxu0 0.0
    %576 = vmatprep.subr.mxu0 0.0
    %577 = vmatpush1.xpose.msra.mxu0 0.0
    %578 = vmatprep.subr.mxu0 0.0
    %579 = vmatpush1.xpose.msra.mxu0 0.0
    %580 = vmatprep.subr.mxu0 0.0
    %581 = vmatpush1.xpose.msra.mxu0 0.0
    %582 = vmatprep.subr.mxu0 0.0
    %583 = vmatpush1.xpose.msra.mxu0 0.0
    %584 = vmatprep.subr.mxu0 0.0
    %585 = vmatpush1.xpose.msra.mxu0 0.0
    %586 = vmatprep.subr.mxu0 0.0
    %587 = vmatpush1.xpose.msra.mxu0 0.0
    %588 = vmatprep.mubr.f32.mxu0 0.0
    %589 = vmatmul.mubr.f32.gmra.mrb[0].mxu0 %v520
    %v590 = vpop.f32.mrb[0].mxu0
    %v591 = vadd.f32 0.0, %v590
    %v592 = vpop.f32.mrb[0].mxu0
    %593 = vdwg.mxu0
    %594 = vrot.lane.b32.xlu0 %v208, 96
    %v595 = vpop.permute.xlu0 %594
    %v596 = vsel %vm215, %v208, 0
    %v598 = vsel %vm215, %v595, 0
    %600 = vmatprep.subr.mxu0 0.0
    %601 = vmatpush1.xpose.msra.mxu0 %v598
    %602 = vmatprep.subr.mxu0 0.0
    %603 = vmatpush1.xpose.msra.mxu0 0.0
    %604 = vmatprep.subr.mxu0 0.0
    %605 = vmatpush1.xpose.msra.mxu0 0.0
    %606 = vmatprep.subr.mxu0 0.0
    %607 = vmatpush1.xpose.msra.mxu0 0.0
    %608 = vmatprep.subr.mxu0 0.0
    %609 = vmatpush1.xpose.msra.mxu0 0.0
    %610 = vmatprep.subr.mxu0 0.0
    %611 = vmatpush1.xpose.msra.mxu0 0.0
    %612 = vmatprep.subr.mxu0 0.0
    %613 = vmatpush1.xpose.msra.mxu0 0.0
    %614 = vmatprep.subr.mxu0 0.0
    %615 = vmatpush1.xpose.msra.mxu0 0.0
    %616 = vmatprep.subr.mxu0 0.0
    %617 = vmatpush1.xpose.msra.mxu0 0.0
    %618 = vmatprep.subr.mxu0 0.0
    %619 = vmatpush1.xpose.msra.mxu0 0.0
    %620 = vmatprep.subr.mxu0 0.0
    %621 = vmatpush1.xpose.msra.mxu0 0.0
    %622 = vmatprep.subr.mxu0 0.0
    %623 = vmatpush1.xpose.msra.mxu0 0.0
    %624 = vmatprep.subr.mxu0 0.0
    %625 = vmatpush1.xpose.msra.mxu0 0.0
    %626 = vmatprep.subr.mxu0 0.0
    %627 = vmatpush1.xpose.msra.mxu0 0.0
    %628 = vmatprep.subr.mxu0 0.0
    %629 = vmatpush1.xpose.msra.mxu0 0.0
    %630 = vmatprep.subr.mxu0 0.0
    %631 = vmatpush1.xpose.msra.mxu0 0.0
    %632 = vmatprep.subr.mxu0 0.0
    %633 = vmatpush1.xpose.msra.mxu0 0.0
    %634 = vmatprep.subr.mxu0 0.0
    %635 = vmatpush1.xpose.msra.mxu0 0.0
    %636 = vmatprep.subr.mxu0 0.0
    %637 = vmatpush1.xpose.msra.mxu0 0.0
    %638 = vmatprep.subr.mxu0 0.0
    %639 = vmatpush1.xpose.msra.mxu0 0.0
    %640 = vmatprep.subr.mxu0 0.0
    %641 = vmatpush1.xpose.msra.mxu0 0.0
    %642 = vmatprep.subr.mxu0 0.0
    %643 = vmatpush1.xpose.msra.mxu0 0.0
    %644 = vmatprep.subr.mxu0 0.0
    %645 = vmatpush1.xpose.msra.mxu0 0.0
    %646 = vmatprep.subr.mxu0 0.0
    %647 = vmatpush1.xpose.msra.mxu0 0.0
    %648 = vmatprep.subr.mxu0 0.0
    %649 = vmatpush1.xpose.msra.mxu0 0.0
    %650 = vmatprep.subr.mxu0 0.0
    %651 = vmatpush1.xpose.msra.mxu0 0.0
    %652 = vmatprep.subr.mxu0 0.0
    %653 = vmatpush1.xpose.msra.mxu0 0.0
    %654 = vmatprep.subr.mxu0 0.0
    %655 = vmatpush1.xpose.msra.mxu0 0.0
    %656 = vmatprep.subr.mxu0 0.0
    %657 = vmatpush1.xpose.msra.mxu0 0.0
    %658 = vmatprep.subr.mxu0 0.0
    %659 = vmatpush1.xpose.msra.mxu0 0.0
    %660 = vmatprep.subr.mxu0 0.0
    %661 = vmatpush1.xpose.msra.mxu0 0.0
    %662 = vmatprep.subr.mxu0 0.0
    %663 = vmatpush1.xpose.msra.mxu0 0.0
    %664 = vmatprep.mubr.f32.mxu0 0.0
    %665 = vmatmul.mubr.f32.gmra.mrb[0].mxu0 %v596
    %v666 = vpop.f32.mrb[0].mxu0
    %v667 = vadd.f32 0.0, %v666
    %v668 = vpop.f32.mrb[0].mxu0
    %669 = vdwg.mxu0
    %670 = vrot.lane.b32.xlu0 %v210, 96
    %v671 = vpop.permute.xlu0 %670
    %v672 = vsel %vm215, %v210, 0
    %v674 = vsel %vm215, %v671, 0
    %676 = vmatprep.subr.mxu0 0.0
    %677 = vmatpush1.xpose.msra.mxu0 %v674
    %678 = vmatprep.subr.mxu0 0.0
    %679 = vmatpush1.xpose.msra.mxu0 0.0
    %680 = vmatprep.subr.mxu0 0.0
    %681 = vmatpush1.xpose.msra.mxu0 0.0
    %682 = vmatprep.subr.mxu0 0.0
    %683 = vmatpush1.xpose.msra.mxu0 0.0
    %684 = vmatprep.subr.mxu0 0.0
    %685 = vmatpush1.xpose.msra.mxu0 0.0
    %686 = vmatprep.subr.mxu0 0.0
    %687 = vmatpush1.xpose.msra.mxu0 0.0
    %688 = vmatprep.subr.mxu0 0.0
    %689 = vmatpush1.xpose.msra.mxu0 0.0
    %690 = vmatprep.subr.mxu0 0.0
    %691 = vmatpush1.xpose.msra.mxu0 0.0
    %692 = vmatprep.subr.mxu0 0.0
    %693 = vmatpush1.xpose.msra.mxu0 0.0
    %694 = vmatprep.subr.mxu0 0.0
    %695 = vmatpush1.xpose.msra.mxu0 0.0
    %696 = vmatprep.subr.mxu0 0.0
    %697 = vmatpush1.xpose.msra.mxu0 0.0
    %698 = vmatprep.subr.mxu0 0.0
    %699 = vmatpush1.xpose.msra.mxu0 0.0
    %700 = vmatprep.subr.mxu0 0.0
    %701 = vmatpush1.xpose.msra.mxu0 0.0
    %702 = vmatprep.subr.mxu0 0.0
    %703 = vmatpush1.xpose.msra.mxu0 0.0
    %704 = vmatprep.subr.mxu0 0.0
    %705 = vmatpush1.xpose.msra.mxu0 0.0
    %706 = vmatprep.subr.mxu0 0.0
    %707 = vmatpush1.xpose.msra.mxu0 0.0
    %708 = vmatprep.subr.mxu0 0.0
    %709 = vmatpush1.xpose.msra.mxu0 0.0
    %710 = vmatprep.subr.mxu0 0.0
    %711 = vmatpush1.xpose.msra.mxu0 0.0
    %712 = vmatprep.subr.mxu0 0.0
    %713 = vmatpush1.xpose.msra.mxu0 0.0
    %714 = vmatprep.subr.mxu0 0.0
    %715 = vmatpush1.xpose.msra.mxu0 0.0
    %716 = vmatprep.subr.mxu0 0.0
    %717 = vmatpush1.xpose.msra.mxu0 0.0
    %718 = vmatprep.subr.mxu0 0.0
    %719 = vmatpush1.xpose.msra.mxu0 0.0
    %720 = vmatprep.subr.mxu0 0.0
    %721 = vmatpush1.xpose.msra.mxu0 0.0
    %722 = vmatprep.subr.mxu0 0.0
    %723 = vmatpush1.xpose.msra.mxu0 0.0
    %724 = vmatprep.subr.mxu0 0.0
    %725 = vmatpush1.xpose.msra.mxu0 0.0
    %726 = vmatprep.subr.mxu0 0.0
    %727 = vmatpush1.xpose.msra.mxu0 0.0
    %728 = vmatprep.subr.mxu0 0.0
    %729 = vmatpush1.xpose.msra.mxu0 0.0
    %730 = vmatprep.subr.mxu0 0.0
    %731 = vmatpush1.xpose.msra.mxu0 0.0
    %732 = vmatprep.subr.mxu0 0.0
    %733 = vmatpush1.xpose.msra.mxu0 0.0
    %734 = vmatprep.subr.mxu0 0.0
    %735 = vmatpush1.xpose.msra.mxu0 0.0
    %736 = vmatprep.subr.mxu0 0.0
    %737 = vmatpush1.xpose.msra.mxu0 0.0
    %738 = vmatprep.subr.mxu0 0.0
    %739 = vmatpush1.xpose.msra.mxu0 0.0
    %740 = vmatprep.mubr.f32.mxu0 0.0
    %741 = vmatmul.mubr.f32.gmra.mrb[0].mxu0 %v672
    %v742 = vpop.f32.mrb[0].mxu0
    %v743 = vadd.f32 0.0, %v742
    %v744 = vpop.f32.mrb[0].mxu0
    %745 = vdwg.mxu0
    %746 = vrot.lane.b32.xlu0 %v212, 96
    %v747 = vpop.permute.xlu0 %746
    %v748 = vsel %vm215, %v212, 0
    %v750 = vsel %vm215, %v747, 0
    %752 = vmatprep.subr.mxu0 0.0
    %753 = vmatpush1.xpose.msra.mxu0 %v750
    %754 = vmatprep.subr.mxu0 0.0
    %755 = vmatpush1.xpose.msra.mxu0 0.0
    %756 = vmatprep.subr.mxu0 0.0
    %757 = vmatpush1.xpose.msra.mxu0 0.0
    %758 = vmatprep.subr.mxu0 0.0
    %759 = vmatpush1.xpose.msra.mxu0 0.0
    %760 = vmatprep.subr.mxu0 0.0
    %761 = vmatpush1.xpose.msra.mxu0 0.0
    %762 = vmatprep.subr.mxu0 0.0
    %763 = vmatpush1.xpose.msra.mxu0 0.0
    %764 = vmatprep.subr.mxu0 0.0
    %765 = vmatpush1.xpose.msra.mxu0 0.0
    %766 = vmatprep.subr.mxu0 0.0
    %767 = vmatpush1.xpose.msra.mxu0 0.0
    %768 = vmatprep.subr.mxu0 0.0
    %769 = vmatpush1.xpose.msra.mxu0 0.0
    %770 = vmatprep.subr.mxu0 0.0
    %771 = vmatpush1.xpose.msra.mxu0 0.0
    %772 = vmatprep.subr.mxu0 0.0
    %773 = vmatpush1.xpose.msra.mxu0 0.0
    %774 = vmatprep.subr.mxu0 0.0
    %775 = vmatpush1.xpose.msra.mxu0 0.0
    %776 = vmatprep.subr.mxu0 0.0
    %777 = vmatpush1.xpose.msra.mxu0 0.0
    %778 = vmatprep.subr.mxu0 0.0
    %779 = vmatpush1.xpose.msra.mxu0 0.0
    %780 = vmatprep.subr.mxu0 0.0
    %781 = vmatpush1.xpose.msra.mxu0 0.0
    %782 = vmatprep.subr.mxu0 0.0
    %783 = vmatpush1.xpose.msra.mxu0 0.0
    %784 = vmatprep.subr.mxu0 0.0
    %785 = vmatpush1.xpose.msra.mxu0 0.0
    %786 = vmatprep.subr.mxu0 0.0
    %787 = vmatpush1.xpose.msra.mxu0 0.0
    %788 = vmatprep.subr.mxu0 0.0
    %789 = vmatpush1.xpose.msra.mxu0 0.0
    %790 = vmatprep.subr.mxu0 0.0
    %791 = vmatpush1.xpose.msra.mxu0 0.0
    %792 = vmatprep.subr.mxu0 0.0
    %793 = vmatpush1.xpose.msra.mxu0 0.0
    %794 = vmatprep.subr.mxu0 0.0
    %795 = vmatpush1.xpose.msra.mxu0 0.0
    %796 = vmatprep.subr.mxu0 0.0
    %797 = vmatpush1.xpose.msra.mxu0 0.0
    %798 = vmatprep.subr.mxu0 0.0
    %799 = vmatpush1.xpose.msra.mxu0 0.0
    %800 = vmatprep.subr.mxu0 0.0
    %801 = vmatpush1.xpose.msra.mxu0 0.0
    %802 = vmatprep.subr.mxu0 0.0
    %803 = vmatpush1.xpose.msra.mxu0 0.0
    %804 = vmatprep.subr.mxu0 0.0
    %805 = vmatpush1.xpose.msra.mxu0 0.0
    %806 = vmatprep.subr.mxu0 0.0
    %807 = vmatpush1.xpose.msra.mxu0 0.0
    %808 = vmatprep.subr.mxu0 0.0
    %809 = vmatpush1.xpose.msra.mxu0 0.0
    %810 = vmatprep.subr.mxu0 0.0
    %811 = vmatpush1.xpose.msra.mxu0 0.0
    %812 = vmatprep.subr.mxu0 0.0
    %813 = vmatpush1.xpose.msra.mxu0 0.0
    %814 = vmatprep.subr.mxu0 0.0
    %815 = vmatpush1.xpose.msra.mxu0 0.0
    %816 = vmatprep.mubr.f32.mxu0 0.0
    %817 = vmatmul.mubr.f32.gmra.mrb[0].mxu0 %v748
    %v818 = vpop.f32.mrb[0].mxu0
    %v819 = vadd.f32 0.0, %v818
    %v820 = vpop.f32.mrb[0].mxu0
    %821 = vdwg.mxu0
    %v822 = vmul.f32 %v287, 0.35355338
    %v823 = vmul.f32 %v363, 0.35355338
    %v824 = vmul.f32 %v439, 0.35355338
    %v825 = vmul.f32 %v515, 0.35355338
    %v826 = vmul.f32 %v591, 0.35355338
    %v827 = vmul.f32 %v667, 0.35355338
    %v828 = vmul.f32 %v743, 0.35355338
    %v829 = vmul.f32 %v819, 0.35355338
    %v830 = vsel %vm215, %v822, -inf
    %831 = vmax.xlane.f32.xlu0 %v830
    %v832 = vpop.xlane.xlu0 %831
    %v833 = vsel %vm215, %v823, -inf
    %834 = vmax.xlane.f32.xlu0 %v833
    %v835 = vpop.xlane.xlu0 %834
    %v836 = vsel %vm215, %v824, -inf
    %837 = vmax.xlane.f32.xlu0 %v836
    %v838 = vpop.xlane.xlu0 %837
    %v839 = vsel %vm215, %v825, -inf
    %840 = vmax.xlane.f32.xlu0 %v839
    %v841 = vpop.xlane.xlu0 %840
    %v842 = vsel %vm215, %v826, -inf
    %843 = vmax.xlane.f32.xlu0 %v842
    %v844 = vpop.xlane.xlu0 %843
    %v845 = vsel %vm215, %v827, -inf
    %846 = vmax.xlane.f32.xlu0 %v845
    %v847 = vpop.xlane.xlu0 %846
    %v848 = vsel %vm215, %v828, -inf
    %849 = vmax.xlane.f32.xlu0 %v848
    %v850 = vpop.xlane.xlu0 %849
    %v851 = vsel %vm215, %v829, -inf
    %852 = vmax.xlane.f32.xlu0 %v851
    %v853 = vpop.xlane.xlu0 %852
    %v854 = vsub.f32 %v822, %v832
    %v855 = vsub.f32 %v823, %v835
    %v856 = vsub.f32 %v824, %v838
    %v857 = vsub.f32 %v825, %v841
    %v858 = vsub.f32 %v826, %v844
    %v859 = vsub.f32 %v827, %v847
    %v860 = vsub.f32 %v828, %v850
    %v861 = vsub.f32 %v829, %v853
    %v862 = vmul.f32 %v854, 1.442695
    %v863 = vpow.pop %v862
    %v864 = vmul.f32 %v855, 1.442695
    %v865 = vpow.pop %v864
    %v866 = vmul.f32 %v856, 1.442695
    %v867 = vpow.pop %v866
    %v868 = vmul.f32 %v857, 1.442695
    %v869 = vpow.pop %v868
    %v870 = vmul.f32 %v858, 1.442695
    %v871 = vpow.pop %v870
    %v872 = vmul.f32 %v859, 1.442695
    %v873 = vpow.pop %v872
    %v874 = vmul.f32 %v860, 1.442695
    %v875 = vpow.pop %v874
    %v876 = vmul.f32 %v861, 1.442695
    %v877 = vpow.pop %v876
    %v878 = vsel %vm215, %v863, 0.0
    %879 = vadd.xlane.f32.xlu0 %v878
    %v880 = vpop.xlane.xlu0 %879
    %v881 = vsel %vm215, %v865, 0.0
    %882 = vadd.xlane.f32.xlu0 %v881
    %v883 = vpop.xlane.xlu0 %882
    %v884 = vsel %vm215, %v867, 0.0
    %885 = vadd.xlane.f32.xlu0 %v884
    %v886 = vpop.xlane.xlu0 %885
    %v887 = vsel %vm215, %v869, 0.0
    %888 = vadd.xlane.f32.xlu0 %v887
    %v889 = vpop.xlane.xlu0 %888
    %v890 = vsel %vm215, %v871, 0.0
    %891 = vadd.xlane.f32.xlu0 %v890
    %v892 = vpop.xlane.xlu0 %891
    %v893 = vsel %vm215, %v873, 0.0
    %894 = vadd.xlane.f32.xlu0 %v893
    %v895 = vpop.xlane.xlu0 %894
    %v896 = vsel %vm215, %v875, 0.0
    %897 = vadd.xlane.f32.xlu0 %v896
    %v898 = vpop.xlane.xlu0 %897
    %v899 = vsel %vm215, %v877, 0.0
    %900 = vadd.xlane.f32.xlu0 %v899
    %v901 = vpop.xlane.xlu0 %900
    %v902 = vrcp.pop %v880
    %v903 = vrcp.pop %v883
    %v904 = vrcp.pop %v886
    %v905 = vrcp.pop %v889
    %v906 = vrcp.pop %v892
    %v907 = vrcp.pop %v895
    %v908 = vrcp.pop %v898
    %v909 = vrcp.pop %v901
    %v910 = vmul.f32 %v863, %v902
    %v911 = vmul.f32 %v865, %v903
    %v912 = vmul.f32 %v867, %v904
    %v913 = vmul.f32 %v869, %v905
    %v914 = vmul.f32 %v871, %v906
    %v915 = vmul.f32 %v873, %v907
    %v916 = vmul.f32 %v875, %v908
    %v917 = vmul.f32 %v877, %v909
    %918 = vrot.lane.b32.xlu0 %v191, 64
    %v919 = vpop.permute.xlu0 %918
    %v922 = vsel %vm215, %v910, 0
    %924 = vmatprep.subr.mxu0 0.0
    %925 = vmatpush1.msra.mxu0 %v919
    %926 = vmatprep.subr.mxu0 0.0
    %927 = vmatpush1.msra.mxu0 0.0
    %928 = vmatprep.subr.mxu0 0.0
    %929 = vmatpush1.msra.mxu0 0.0
    %930 = vmatprep.subr.mxu0 0.0
    %931 = vmatpush1.msra.mxu0 0.0
    %932 = vmatprep.subr.mxu0 0.0
    %933 = vmatpush1.msra.mxu0 0.0
    %934 = vmatprep.subr.mxu0 0.0
    %935 = vmatpush1.msra.mxu0 0.0
    %936 = vmatprep.subr.mxu0 0.0
    %937 = vmatpush1.msra.mxu0 0.0
    %938 = vmatprep.subr.mxu0 0.0
    %939 = vmatpush1.msra.mxu0 0.0
    %940 = vmatprep.subr.mxu0 0.0
    %941 = vmatpush1.msra.mxu0 0.0
    %942 = vmatprep.subr.mxu0 0.0
    %943 = vmatpush1.msra.mxu0 0.0
    %944 = vmatprep.subr.mxu0 0.0
    %945 = vmatpush1.msra.mxu0 0.0
    %946 = vmatprep.subr.mxu0 0.0
    %947 = vmatpush1.msra.mxu0 0.0
    %948 = vmatprep.subr.mxu0 0.0
    %949 = vmatpush1.msra.mxu0 0.0
    %950 = vmatprep.subr.mxu0 0.0
    %951 = vmatpush1.msra.mxu0 0.0
    %952 = vmatprep.subr.mxu0 0.0
    %953 = vmatpush1.msra.mxu0 0.0
    %954 = vmatprep.subr.mxu0 0.0
    %955 = vmatpush1.msra.mxu0 0.0
    %956 = vmatprep.subr.mxu0 0.0
    %957 = vmatpush1.msra.mxu0 0.0
    %958 = vmatprep.subr.mxu0 0.0
    %959 = vmatpush1.msra.mxu0 0.0
    %960 = vmatprep.subr.mxu0 0.0
    %961 = vmatpush1.msra.mxu0 0.0
    %962 = vmatprep.subr.mxu0 0.0
    %963 = vmatpush1.msra.mxu0 0.0
    %964 = vmatprep.subr.mxu0 0.0
    %965 = vmatpush1.msra.mxu0 0.0
    %966 = vmatprep.subr.mxu0 0.0
    %967 = vmatpush1.msra.mxu0 0.0
    %968 = vmatprep.subr.mxu0 0.0
    %969 = vmatpush1.msra.mxu0 0.0
    %970 = vmatprep.subr.mxu0 0.0
    %971 = vmatpush1.msra.mxu0 0.0
    %972 = vmatprep.subr.mxu0 0.0
    %973 = vmatpush1.msra.mxu0 0.0
    %974 = vmatprep.subr.mxu0 0.0
    %975 = vmatpush1.msra.mxu0 0.0
    %976 = vmatprep.subr.mxu0 0.0
    %977 = vmatpush1.msra.mxu0 0.0
    %978 = vmatprep.subr.mxu0 0.0
    %979 = vmatpush1.msra.mxu0 0.0
    %980 = vmatprep.subr.mxu0 0.0
    %981 = vmatpush1.msra.mxu0 0.0
    %982 = vmatprep.subr.mxu0 0.0
    %983 = vmatpush1.msra.mxu0 0.0
    %984 = vmatprep.subr.mxu0 0.0
    %985 = vmatpush1.msra.mxu0 0.0
    %986 = vmatprep.subr.mxu0 0.0
    %987 = vmatpush1.msra.mxu0 0.0
    %988 = vmatprep.mubr.f32.mxu0 0.0
    %989 = vmatmul.mubr.f32.gmra.mrb[0].mxu0 %v922
    %v990 = vpop.f32.mrb[0].mxu0
    %v991 = vadd.f32 0.0, %v990
    %v992 = vpop.f32.mrb[0].mxu0
    %993 = vdwg.mxu0
    %994 = vrot.lane.b32.xlu0 %v201, 64
    %v995 = vpop.permute.xlu0 %994
    %v998 = vsel %vm215, %v911, 0
    %1000 = vmatprep.subr.mxu0 0.0
    %1001 = vmatpush1.msra.mxu0 %v995
    %1002 = vmatprep.subr.mxu0 0.0
    %1003 = vmatpush1.msra.mxu0 0.0
    %1004 = vmatprep.subr.mxu0 0.0
    %1005 = vmatpush1.msra.mxu0 0.0
    %1006 = vmatprep.subr.mxu0 0.0
    %1007 = vmatpush1.msra.mxu0 0.0
    %1008 = vmatprep.subr.mxu0 0.0
    %1009 = vmatpush1.msra.mxu0 0.0
    %1010 = vmatprep.subr.mxu0 0.0
    %1011 = vmatpush1.msra.mxu0 0.0
    %1012 = vmatprep.subr.mxu0 0.0
    %1013 = vmatpush1.msra.mxu0 0.0
    %1014 = vmatprep.subr.mxu0 0.0
    %1015 = vmatpush1.msra.mxu0 0.0
    %1016 = vmatprep.subr.mxu0 0.0
    %1017 = vmatpush1.msra.mxu0 0.0
    %1018 = vmatprep.subr.mxu0 0.0
    %1019 = vmatpush1.msra.mxu0 0.0
    %1020 = vmatprep.subr.mxu0 0.0
    %1021 = vmatpush1.msra.mxu0 0.0
    %1022 = vmatprep.subr.mxu0 0.0
    %1023 = vmatpush1.msra.mxu0 0.0
    %1024 = vmatprep.subr.mxu0 0.0
    %1025 = vmatpush1.msra.mxu0 0.0
    %1026 = vmatprep.subr.mxu0 0.0
    %1027 = vmatpush1.msra.mxu0 0.0
    %1028 = vmatprep.subr.mxu0 0.0
    %1029 = vmatpush1.msra.mxu0 0.0
    %1030 = vmatprep.subr.mxu0 0.0
    %1031 = vmatpush1.msra.mxu0 0.0
    %1032 = vmatprep.subr.mxu0 0.0
    %1033 = vmatpush1.msra.mxu0 0.0
    %1034 = vmatprep.subr.mxu0 0.0
    %1035 = vmatpush1.msra.mxu0 0.0
    %1036 = vmatprep.subr.mxu0 0.0
    %1037 = vmatpush1.msra.mxu0 0.0
    %1038 = vmatprep.subr.mxu0 0.0
    %1039 = vmatpush1.msra.mxu0 0.0
    %1040 = vmatprep.subr.mxu0 0.0
    %1041 = vmatpush1.msra.mxu0 0.0
    %1042 = vmatprep.subr.mxu0 0.0
    %1043 = vmatpush1.msra.mxu0 0.0
    %1044 = vmatprep.subr.mxu0 0.0
    %1045 = vmatpush1.msra.mxu0 0.0
    %1046 = vmatprep.subr.mxu0 0.0
    %1047 = vmatpush1.msra.mxu0 0.0
    %1048 = vmatprep.subr.mxu0 0.0
    %1049 = vmatpush1.msra.mxu0 0.0
    %1050 = vmatprep.subr.mxu0 0.0
    %1051 = vmatpush1.msra.mxu0 0.0
    %1052 = vmatprep.subr.mxu0 0.0
    %1053 = vmatpush1.msra.mxu0 0.0
    %1054 = vmatprep.subr.mxu0 0.0
    %1055 = vmatpush1.msra.mxu0 0.0
    %1056 = vmatprep.subr.mxu0 0.0
    %1057 = vmatpush1.msra.mxu0 0.0
    %1058 = vmatprep.subr.mxu0 0.0
    %1059 = vmatpush1.msra.mxu0 0.0
    %1060 = vmatprep.subr.mxu0 0.0
    %1061 = vmatpush1.msra.mxu0 0.0
    %1062 = vmatprep.subr.mxu0 0.0
    %1063 = vmatpush1.msra.mxu0 0.0
    %1064 = vmatprep.mubr.f32.mxu0 0.0
    %1065 = vmatmul.mubr.f32.gmra.mrb[0].mxu0 %v998
    %v1066 = vpop.f32.mrb[0].mxu0
    %v1067 = vadd.f32 0.0, %v1066
    %v1068 = vpop.f32.mrb[0].mxu0
    %1069 = vdwg.mxu0
    %1070 = vrot.lane.b32.xlu0 %v203, 64
    %v1071 = vpop.permute.xlu0 %1070
    %v1074 = vsel %vm215, %v912, 0
    %1076 = vmatprep.subr.mxu0 0.0
    %1077 = vmatpush1.msra.mxu0 %v1071
    %1078 = vmatprep.subr.mxu0 0.0
    %1079 = vmatpush1.msra.mxu0 0.0
    %1080 = vmatprep.subr.mxu0 0.0
    %1081 = vmatpush1.msra.mxu0 0.0
    %1082 = vmatprep.subr.mxu0 0.0
    %1083 = vmatpush1.msra.mxu0 0.0
    %1084 = vmatprep.subr.mxu0 0.0
    %1085 = vmatpush1.msra.mxu0 0.0
    %1086 = vmatprep.subr.mxu0 0.0
    %1087 = vmatpush1.msra.mxu0 0.0
    %1088 = vmatprep.subr.mxu0 0.0
    %1089 = vmatpush1.msra.mxu0 0.0
    %1090 = vmatprep.subr.mxu0 0.0
    %1091 = vmatpush1.msra.mxu0 0.0
    %1092 = vmatprep.subr.mxu0 0.0
    %1093 = vmatpush1.msra.mxu0 0.0
    %1094 = vmatprep.subr.mxu0 0.0
    %1095 = vmatpush1.msra.mxu0 0.0
    %1096 = vmatprep.subr.mxu0 0.0
    %1097 = vmatpush1.msra.mxu0 0.0
    %1098 = vmatprep.subr.mxu0 0.0
    %1099 = vmatpush1.msra.mxu0 0.0
    %1100 = vmatprep.subr.mxu0 0.0
    %1101 = vmatpush1.msra.mxu0 0.0
    %1102 = vmatprep.subr.mxu0 0.0
    %1103 = vmatpush1.msra.mxu0 0.0
    %1104 = vmatprep.subr.mxu0 0.0
    %1105 = vmatpush1.msra.mxu0 0.0
    %1106 = vmatprep.subr.mxu0 0.0
    %1107 = vmatpush1.msra.mxu0 0.0
    %1108 = vmatprep.subr.mxu0 0.0
    %1109 = vmatpush1.msra.mxu0 0.0
    %1110 = vmatprep.subr.mxu0 0.0
    %1111 = vmatpush1.msra.mxu0 0.0
    %1112 = vmatprep.subr.mxu0 0.0
    %1113 = vmatpush1.msra.mxu0 0.0
    %1114 = vmatprep.subr.mxu0 0.0
    %1115 = vmatpush1.msra.mxu0 0.0
    %1116 = vmatprep.subr.mxu0 0.0
    %1117 = vmatpush1.msra.mxu0 0.0
    %1118 = vmatprep.subr.mxu0 0.0
    %1119 = vmatpush1.msra.mxu0 0.0
    %1120 = vmatprep.subr.mxu0 0.0
    %1121 = vmatpush1.msra.mxu0 0.0
    %1122 = vmatprep.subr.mxu0 0.0
    %1123 = vmatpush1.msra.mxu0 0.0
    %1124 = vmatprep.subr.mxu0 0.0
    %1125 = vmatpush1.msra.mxu0 0.0
    %1126 = vmatprep.subr.mxu0 0.0
    %1127 = vmatpush1.msra.mxu0 0.0
    %1128 = vmatprep.subr.mxu0 0.0
    %1129 = vmatpush1.msra.mxu0 0.0
    %1130 = vmatprep.subr.mxu0 0.0
    %1131 = vmatpush1.msra.mxu0 0.0
    %1132 = vmatprep.subr.mxu0 0.0
    %1133 = vmatpush1.msra.mxu0 0.0
    %1134 = vmatprep.subr.mxu0 0.0
    %1135 = vmatpush1.msra.mxu0 0.0
    %1136 = vmatprep.subr.mxu0 0.0
    %1137 = vmatpush1.msra.mxu0 0.0
    %1138 = vmatprep.subr.mxu0 0.0
    %1139 = vmatpush1.msra.mxu0 0.0
    %1140 = vmatprep.mubr.f32.mxu0 0.0
    %1141 = vmatmul.mubr.f32.gmra.mrb[0].mxu0 %v1074
    %v1142 = vpop.f32.mrb[0].mxu0
    %v1143 = vadd.f32 0.0, %v1142
    %v1144 = vpop.f32.mrb[0].mxu0
    %1145 = vdwg.mxu0
    %1146 = vrot.lane.b32.xlu0 %v205, 64
    %v1147 = vpop.permute.xlu0 %1146
    %v1150 = vsel %vm215, %v913, 0
    %1152 = vmatprep.subr.mxu0 0.0
    %1153 = vmatpush1.msra.mxu0 %v1147
    %1154 = vmatprep.subr.mxu0 0.0
    %1155 = vmatpush1.msra.mxu0 0.0
    %1156 = vmatprep.subr.mxu0 0.0
    %1157 = vmatpush1.msra.mxu0 0.0
    %1158 = vmatprep.subr.mxu0 0.0
    %1159 = vmatpush1.msra.mxu0 0.0
    %1160 = vmatprep.subr.mxu0 0.0
    %1161 = vmatpush1.msra.mxu0 0.0
    %1162 = vmatprep.subr.mxu0 0.0
    %1163 = vmatpush1.msra.mxu0 0.0
    %1164 = vmatprep.subr.mxu0 0.0
    %1165 = vmatpush1.msra.mxu0 0.0
    %1166 = vmatprep.subr.mxu0 0.0
    %1167 = vmatpush1.msra.mxu0 0.0
    %1168 = vmatprep.subr.mxu0 0.0
    %1169 = vmatpush1.msra.mxu0 0.0
    %1170 = vmatprep.subr.mxu0 0.0
    %1171 = vmatpush1.msra.mxu0 0.0
    %1172 = vmatprep.subr.mxu0 0.0
    %1173 = vmatpush1.msra.mxu0 0.0
    %1174 = vmatprep.subr.mxu0 0.0
    %1175 = vmatpush1.msra.mxu0 0.0
    %1176 = vmatprep.subr.mxu0 0.0
    %1177 = vmatpush1.msra.mxu0 0.0
    %1178 = vmatprep.subr.mxu0 0.0
    %1179 = vmatpush1.msra.mxu0 0.0
    %1180 = vmatprep.subr.mxu0 0.0
    %1181 = vmatpush1.msra.mxu0 0.0
    %1182 = vmatprep.subr.mxu0 0.0
    %1183 = vmatpush1.msra.mxu0 0.0
    %1184 = vmatprep.subr.mxu0 0.0
    %1185 = vmatpush1.msra.mxu0 0.0
    %1186 = vmatprep.subr.mxu0 0.0
    %1187 = vmatpush1.msra.mxu0 0.0
    %1188 = vmatprep.subr.mxu0 0.0
    %1189 = vmatpush1.msra.mxu0 0.0
    %1190 = vmatprep.subr.mxu0 0.0
    %1191 = vmatpush1.msra.mxu0 0.0
    %1192 = vmatprep.subr.mxu0 0.0
    %1193 = vmatpush1.msra.mxu0 0.0
    %1194 = vmatprep.subr.mxu0 0.0
    %1195 = vmatpush1.msra.mxu0 0.0
    %1196 = vmatprep.subr.mxu0 0.0
    %1197 = vmatpush1.msra.mxu0 0.0
    %1198 = vmatprep.subr.mxu0 0.0
    %1199 = vmatpush1.msra.mxu0 0.0
    %1200 = vmatprep.subr.mxu0 0.0
    %1201 = vmatpush1.msra.mxu0 0.0
    %1202 = vmatprep.subr.mxu0 0.0
    %1203 = vmatpush1.msra.mxu0 0.0
    %1204 = vmatprep.subr.mxu0 0.0
    %1205 = vmatpush1.msra.mxu0 0.0
    %1206 = vmatprep.subr.mxu0 0.0
    %1207 = vmatpush1.msra.mxu0 0.0
    %1208 = vmatprep.subr.mxu0 0.0
    %1209 = vmatpush1.msra.mxu0 0.0
    %1210 = vmatprep.subr.mxu0 0.0
    %1211 = vmatpush1.msra.mxu0 0.0
    %1212 = vmatprep.subr.mxu0 0.0
    %1213 = vmatpush1.msra.mxu0 0.0
    %1214 = vmatprep.subr.mxu0 0.0
    %1215 = vmatpush1.msra.mxu0 0.0
    %1216 = vmatprep.mubr.f32.mxu0 0.0
    %1217 = vmatmul.mubr.f32.gmra.mrb[0].mxu0 %v1150
    %v1218 = vpop.f32.mrb[0].mxu0
    %v1219 = vadd.f32 0.0, %v1218
    %v1220 = vpop.f32.mrb[0].mxu0
    %1221 = vdwg.mxu0
    %1222 = vrot.lane.b32.xlu0 %v196, 64
    %v1223 = vpop.permute.xlu0 %1222
    %v1226 = vsel %vm215, %v914, 0
    %1228 = vmatprep.subr.mxu0 0.0
    %1229 = vmatpush1.msra.mxu0 %v1223
    %1230 = vmatprep.subr.mxu0 0.0
    %1231 = vmatpush1.msra.mxu0 0.0
    %1232 = vmatprep.subr.mxu0 0.0
    %1233 = vmatpush1.msra.mxu0 0.0
    %1234 = vmatprep.subr.mxu0 0.0
    %1235 = vmatpush1.msra.mxu0 0.0
    %1236 = vmatprep.subr.mxu0 0.0
    %1237 = vmatpush1.msra.mxu0 0.0
    %1238 = vmatprep.subr.mxu0 0.0
    %1239 = vmatpush1.msra.mxu0 0.0
    %1240 = vmatprep.subr.mxu0 0.0
    %1241 = vmatpush1.msra.mxu0 0.0
    %1242 = vmatprep.subr.mxu0 0.0
    %1243 = vmatpush1.msra.mxu0 0.0
    %1244 = vmatprep.subr.mxu0 0.0
    %1245 = vmatpush1.msra.mxu0 0.0
    %1246 = vmatprep.subr.mxu0 0.0
    %1247 = vmatpush1.msra.mxu0 0.0
    %1248 = vmatprep.subr.mxu0 0.0
    %1249 = vmatpush1.msra.mxu0 0.0
    %1250 = vmatprep.subr.mxu0 0.0
    %1251 = vmatpush1.msra.mxu0 0.0
    %1252 = vmatprep.subr.mxu0 0.0
    %1253 = vmatpush1.msra.mxu0 0.0
    %1254 = vmatprep.subr.mxu0 0.0
    %1255 = vmatpush1.msra.mxu0 0.0
    %1256 = vmatprep.subr.mxu0 0.0
    %1257 = vmatpush1.msra.mxu0 0.0
    %1258 = vmatprep.subr.mxu0 0.0
    %1259 = vmatpush1.msra.mxu0 0.0
    %1260 = vmatprep.subr.mxu0 0.0
    %1261 = vmatpush1.msra.mxu0 0.0
    %1262 = vmatprep.subr.mxu0 0.0
    %1263 = vmatpush1.msra.mxu0 0.0
    %1264 = vmatprep.subr.mxu0 0.0
    %1265 = vmatpush1.msra.mxu0 0.0
    %1266 = vmatprep.subr.mxu0 0.0
    %1267 = vmatpush1.msra.mxu0 0.0
    %1268 = vmatprep.subr.mxu0 0.0
    %1269 = vmatpush1.msra.mxu0 0.0
    %1270 = vmatprep.subr.mxu0 0.0
    %1271 = vmatpush1.msra.mxu0 0.0
    %1272 = vmatprep.subr.mxu0 0.0
    %1273 = vmatpush1.msra.mxu0 0.0
    %1274 = vmatprep.subr.mxu0 0.0
    %1275 = vmatpush1.msra.mxu0 0.0
    %1276 = vmatprep.subr.mxu0 0.0
    %1277 = vmatpush1.msra.mxu0 0.0
    %1278 = vmatprep.subr.mxu0 0.0
    %1279 = vmatpush1.msra.mxu0 0.0
    %1280 = vmatprep.subr.mxu0 0.0
    %1281 = vmatpush1.msra.mxu0 0.0
    %1282 = vmatprep.subr.mxu0 0.0
    %1283 = vmatpush1.msra.mxu0 0.0
    %1284 = vmatprep.subr.mxu0 0.0
    %1285 = vmatpush1.msra.mxu0 0.0
    %1286 = vmatprep.subr.mxu0 0.0
    %1287 = vmatpush1.msra.mxu0 0.0
    %1288 = vmatprep.subr.mxu0 0.0
    %1289 = vmatpush1.msra.mxu0 0.0
    %1290 = vmatprep.subr.mxu0 0.0
    %1291 = vmatpush1.msra.mxu0 0.0
    %1292 = vmatprep.mubr.f32.mxu0 0.0
    %1293 = vmatmul.mubr.f32.gmra.mrb[0].mxu0 %v1226
    %v1294 = vpop.f32.mrb[0].mxu0
    %v1295 = vadd.f32 0.0, %v1294
    %v1296 = vpop.f32.mrb[0].mxu0
    %1297 = vdwg.mxu0
    %1298 = vrot.lane.b32.xlu0 %v208, 64
    %v1299 = vpop.permute.xlu0 %1298
    %v1302 = vsel %vm215, %v915, 0
    %1304 = vmatprep.subr.mxu0 0.0
    %1305 = vmatpush1.msra.mxu0 %v1299
    %1306 = vmatprep.subr.mxu0 0.0
    %1307 = vmatpush1.msra.mxu0 0.0
    %1308 = vmatprep.subr.mxu0 0.0
    %1309 = vmatpush1.msra.mxu0 0.0
    %1310 = vmatprep.subr.mxu0 0.0
    %1311 = vmatpush1.msra.mxu0 0.0
    %1312 = vmatprep.subr.mxu0 0.0
    %1313 = vmatpush1.msra.mxu0 0.0
    %1314 = vmatprep.subr.mxu0 0.0
    %1315 = vmatpush1.msra.mxu0 0.0
    %1316 = vmatprep.subr.mxu0 0.0
    %1317 = vmatpush1.msra.mxu0 0.0
    %1318 = vmatprep.subr.mxu0 0.0
    %1319 = vmatpush1.msra.mxu0 0.0
    %1320 = vmatprep.subr.mxu0 0.0
    %1321 = vmatpush1.msra.mxu0 0.0
    %1322 = vmatprep.subr.mxu0 0.0
    %1323 = vmatpush1.msra.mxu0 0.0
    %1324 = vmatprep.subr.mxu0 0.0
    %1325 = vmatpush1.msra.mxu0 0.0
    %1326 = vmatprep.subr.mxu0 0.0
    %1327 = vmatpush1.msra.mxu0 0.0
    %1328 = vmatprep.subr.mxu0 0.0
    %1329 = vmatpush1.msra.mxu0 0.0
    %1330 = vmatprep.subr.mxu0 0.0
    %1331 = vmatpush1.msra.mxu0 0.0
    %1332 = vmatprep.subr.mxu0 0.0
    %1333 = vmatpush1.msra.mxu0 0.0
    %1334 = vmatprep.subr.mxu0 0.0
    %1335 = vmatpush1.msra.mxu0 0.0
    %1336 = vmatprep.subr.mxu0 0.0
    %1337 = vmatpush1.msra.mxu0 0.0
    %1338 = vmatprep.subr.mxu0 0.0
    %1339 = vmatpush1.msra.mxu0 0.0
    %1340 = vmatprep.subr.mxu0 0.0
    %1341 = vmatpush1.msra.mxu0 0.0
    %1342 = vmatprep.subr.mxu0 0.0
    %1343 = vmatpush1.msra.mxu0 0.0
    %1344 = vmatprep.subr.mxu0 0.0
    %1345 = vmatpush1.msra.mxu0 0.0
    %1346 = vmatprep.subr.mxu0 0.0
    %1347 = vmatpush1.msra.mxu0 0.0
    %1348 = vmatprep.subr.mxu0 0.0
    %1349 = vmatpush1.msra.mxu0 0.0
    %1350 = vmatprep.subr.mxu0 0.0
    %1351 = vmatpush1.msra.mxu0 0.0
    %1352 = vmatprep.subr.mxu0 0.0
    %1353 = vmatpush1.msra.mxu0 0.0
    %1354 = vmatprep.subr.mxu0 0.0
    %1355 = vmatpush1.msra.mxu0 0.0
    %1356 = vmatprep.subr.mxu0 0.0
    %1357 = vmatpush1.msra.mxu0 0.0
    %1358 = vmatprep.subr.mxu0 0.0
    %1359 = vmatpush1.msra.mxu0 0.0
    %1360 = vmatprep.subr.mxu0 0.0
    %1361 = vmatpush1.msra.mxu0 0.0
    %1362 = vmatprep.subr.mxu0 0.0
    %1363 = vmatpush1.msra.mxu0 0.0
    %1364 = vmatprep.subr.mxu0 0.0
    %1365 = vmatpush1.msra.mxu0 0.0
    %1366 = vmatprep.subr.mxu0 0.0
    %1367 = vmatpush1.msra.mxu0 0.0
    %1368 = vmatprep.mubr.f32.mxu0 0.0
    %1369 = vmatmul.mubr.f32.gmra.mrb[0].mxu0 %v1302
    %v1370 = vpop.f32.mrb[0].mxu0
    %v1371 = vadd.f32 0.0, %v1370
    %v1372 = vpop.f32.mrb[0].mxu0
    %1373 = vdwg.mxu0
    %1374 = vrot.lane.b32.xlu0 %v210, 64
    %v1375 = vpop.permute.xlu0 %1374
    %v1378 = vsel %vm215, %v916, 0
    %1380 = vmatprep.subr.mxu0 0.0
    %1381 = vmatpush1.msra.mxu0 %v1375
    %1382 = vmatprep.subr.mxu0 0.0
    %1383 = vmatpush1.msra.mxu0 0.0
    %1384 = vmatprep.subr.mxu0 0.0
    %1385 = vmatpush1.msra.mxu0 0.0
    %1386 = vmatprep.subr.mxu0 0.0
    %1387 = vmatpush1.msra.mxu0 0.0
    %1388 = vmatprep.subr.mxu0 0.0
    %1389 = vmatpush1.msra.mxu0 0.0
    %1390 = vmatprep.subr.mxu0 0.0
    %1391 = vmatpush1.msra.mxu0 0.0
    %1392 = vmatprep.subr.mxu0 0.0
    %1393 = vmatpush1.msra.mxu0 0.0
    %1394 = vmatprep.subr.mxu0 0.0
    %1395 = vmatpush1.msra.mxu0 0.0
    %1396 = vmatprep.subr.mxu0 0.0
    %1397 = vmatpush1.msra.mxu0 0.0
    %1398 = vmatprep.subr.mxu0 0.0
    %1399 = vmatpush1.msra.mxu0 0.0
    %1400 = vmatprep.subr.mxu0 0.0
    %1401 = vmatpush1.msra.mxu0 0.0
    %1402 = vmatprep.subr.mxu0 0.0
    %1403 = vmatpush1.msra.mxu0 0.0
    %1404 = vmatprep.subr.mxu0 0.0
    %1405 = vmatpush1.msra.mxu0 0.0
    %1406 = vmatprep.subr.mxu0 0.0
    %1407 = vmatpush1.msra.mxu0 0.0
    %1408 = vmatprep.subr.mxu0 0.0
    %1409 = vmatpush1.msra.mxu0 0.0
    %1410 = vmatprep.subr.mxu0 0.0
    %1411 = vmatpush1.msra.mxu0 0.0
    %1412 = vmatprep.subr.mxu0 0.0
    %1413 = vmatpush1.msra.mxu0 0.0
    %1414 = vmatprep.subr.mxu0 0.0
    %1415 = vmatpush1.msra.mxu0 0.0
    %1416 = vmatprep.subr.mxu0 0.0
    %1417 = vmatpush1.msra.mxu0 0.0
    %1418 = vmatprep.subr.mxu0 0.0
    %1419 = vmatpush1.msra.mxu0 0.0
    %1420 = vmatprep.subr.mxu0 0.0
    %1421 = vmatpush1.msra.mxu0 0.0
    %1422 = vmatprep.subr.mxu0 0.0
    %1423 = vmatpush1.msra.mxu0 0.0
    %1424 = vmatprep.subr.mxu0 0.0
    %1425 = vmatpush1.msra.mxu0 0.0
    %1426 = vmatprep.subr.mxu0 0.0
    %1427 = vmatpush1.msra.mxu0 0.0
    %1428 = vmatprep.subr.mxu0 0.0
    %1429 = vmatpush1.msra.mxu0 0.0
    %1430 = vmatprep.subr.mxu0 0.0
    %1431 = vmatpush1.msra.mxu0 0.0
    %1432 = vmatprep.subr.mxu0 0.0
    %1433 = vmatpush1.msra.mxu0 0.0
    %1434 = vmatprep.subr.mxu0 0.0
    %1435 = vmatpush1.msra.mxu0 0.0
    %1436 = vmatprep.subr.mxu0 0.0
    %1437 = vmatpush1.msra.mxu0 0.0
    %1438 = vmatprep.subr.mxu0 0.0
    %1439 = vmatpush1.msra.mxu0 0.0
    %1440 = vmatprep.subr.mxu0 0.0
    %1441 = vmatpush1.msra.mxu0 0.0
    %1442 = vmatprep.subr.mxu0 0.0
    %1443 = vmatpush1.msra.mxu0 0.0
    %1444 = vmatprep.mubr.f32.mxu0 0.0
    %1445 = vmatmul.mubr.f32.gmra.mrb[0].mxu0 %v1378
    %v1446 = vpop.f32.mrb[0].mxu0
    %v1447 = vadd.f32 0.0, %v1446
    %v1448 = vpop.f32.mrb[0].mxu0
    %1449 = vdwg.mxu0
    %1450 = vrot.lane.b32.xlu0 %v212, 64
    %v1451 = vpop.permute.xlu0 %1450
    %v1454 = vsel %vm215, %v917, 0
    %1456 = vmatprep.subr.mxu0 0.0
    %1457 = vmatpush1.msra.mxu0 %v1451
    %1458 = vmatprep.subr.mxu0 0.0
    %1459 = vmatpush1.msra.mxu0 0.0
    %1460 = vmatprep.subr.mxu0 0.0
    %1461 = vmatpush1.msra.mxu0 0.0
    %1462 = vmatprep.subr.mxu0 0.0
    %1463 = vmatpush1.msra.mxu0 0.0
    %1464 = vmatprep.subr.mxu0 0.0
    %1465 = vmatpush1.msra.mxu0 0.0
    %1466 = vmatprep.subr.mxu0 0.0
    %1467 = vmatpush1.msra.mxu0 0.0
    %1468 = vmatprep.subr.mxu0 0.0
    %1469 = vmatpush1.msra.mxu0 0.0
    %1470 = vmatprep.subr.mxu0 0.0
    %1471 = vmatpush1.msra.mxu0 0.0
    %1472 = vmatprep.subr.mxu0 0.0
    %1473 = vmatpush1.msra.mxu0 0.0
    %1474 = vmatprep.subr.mxu0 0.0
    %1475 = vmatpush1.msra.mxu0 0.0
    %1476 = vmatprep.subr.mxu0 0.0
    %1477 = vmatpush1.msra.mxu0 0.0
    %1478 = vmatprep.subr.mxu0 0.0
    %1479 = vmatpush1.msra.mxu0 0.0
    %1480 = vmatprep.subr.mxu0 0.0
    %1481 = vmatpush1.msra.mxu0 0.0
    %1482 = vmatprep.subr.mxu0 0.0
    %1483 = vmatpush1.msra.mxu0 0.0
    %1484 = vmatprep.subr.mxu0 0.0
    %1485 = vmatpush1.msra.mxu0 0.0
    %1486 = vmatprep.subr.mxu0 0.0
    %1487 = vmatpush1.msra.mxu0 0.0
    %1488 = vmatprep.subr.mxu0 0.0
    %1489 = vmatpush1.msra.mxu0 0.0
    %1490 = vmatprep.subr.mxu0 0.0
    %1491 = vmatpush1.msra.mxu0 0.0
    %1492 = vmatprep.subr.mxu0 0.0
    %1493 = vmatpush1.msra.mxu0 0.0
    %1494 = vmatprep.subr.mxu0 0.0
    %1495 = vmatpush1.msra.mxu0 0.0
    %1496 = vmatprep.subr.mxu0 0.0
    %1497 = vmatpush1.msra.mxu0 0.0
    %1498 = vmatprep.subr.mxu0 0.0
    %1499 = vmatpush1.msra.mxu0 0.0
    %1500 = vmatprep.subr.mxu0 0.0
    %1501 = vmatpush1.msra.mxu0 0.0
    %1502 = vmatprep.subr.mxu0 0.0
    %1503 = vmatpush1.msra.mxu0 0.0
    %1504 = vmatprep.subr.mxu0 0.0
    %1505 = vmatpush1.msra.mxu0 0.0
    %1506 = vmatprep.subr.mxu0 0.0
    %1507 = vmatpush1.msra.mxu0 0.0
    %1508 = vmatprep.subr.mxu0 0.0
    %1509 = vmatpush1.msra.mxu0 0.0
    %1510 = vmatprep.subr.mxu0 0.0
    %1511 = vmatpush1.msra.mxu0 0.0
    %1512 = vmatprep.subr.mxu0 0.0
    %1513 = vmatpush1.msra.mxu0 0.0
    %1514 = vmatprep.subr.mxu0 0.0
    %1515 = vmatpush1.msra.mxu0 0.0
    %1516 = vmatprep.subr.mxu0 0.0
    %1517 = vmatpush1.msra.mxu0 0.0
    %1518 = vmatprep.subr.mxu0 0.0
    %1519 = vmatpush1.msra.mxu0 0.0
    %1520 = vmatprep.mubr.f32.mxu0 0.0
    %1521 = vmatmul.mubr.f32.gmra.mrb[0].mxu0 %v1454
    %v1522 = vpop.f32.mrb[0].mxu0
    %v1523 = vadd.f32 0.0, %v1522
    %v1524 = vpop.f32.mrb[0].mxu0
    %1525 = vdwg.mxu0
    %1527 = vrot.lane.b32.xlu0 %v1067, 8
    %v1528 = vpop.permute.xlu0 %1527
    %1531 = vrot.lane.b32.xlu0 %v1143, 16
    %v1532 = vpop.permute.xlu0 %1531
    %1535 = vrot.lane.b32.xlu0 %v1219, 24
    %v1536 = vpop.permute.xlu0 %1535
    %v1538 = vsel %vm215, %v991, %v1528
    %vm1539 = vcmask 130048
    %v1540 = vsel %vm1539, %v1538, %v1532
    %vm1541 = vcmask 195584
    %v1542 = vsel %vm1541, %v1540, %v1536
    %1544 = vrot.lane.b32.xlu0 %v1371, 8
    %v1545 = vpop.permute.xlu0 %1544
    %1548 = vrot.lane.b32.xlu0 %v1447, 16
    %v1549 = vpop.permute.xlu0 %1548
    %1552 = vrot.lane.b32.xlu0 %v1523, 24
    %v1553 = vpop.permute.xlu0 %1552
    %v1555 = vsel %vm215, %v1295, %v1545
    %v1556 = vsel %vm1539, %v1555, %v1549
    %v1557 = vsel %vm1541, %v1556, %v1553
    %v1558 = vld [vmem:[%s5] sm:$0xff]
    %v1559 = vld [vmem:[%s5 + $0x8] sm:$0xff]
    %v1560 = vld [vmem:[%s5 + $0x10] sm:$0xff]
    %v1561 = vld [vmem:[%s5 + $0x18] sm:$0xff]
    %v1562 = vld [vmem:[%s6] sm:$0x1]
    %v1564 = vlaneseq
    %v1565 = vshrl.u32 %v1564, 7
    %v1566 = vsub.s32 0, %v1565
    %v1567 = vrot.slane %v1562, %v1566
    %v1570 = vsel %vm63, %v1542, 0
    %v1573 = vsel %vm63, %v1557, 0
    %1575 = vmatprep.subr.mxu0 0.0
    %1576 = vmatpush1.msra.mxu0 %v1558
    %1577 = vmatprep.subr.mxu0 0.0
    %1578 = vmatpush1.msra.mxu0 %v1559
    %1579 = vmatprep.subr.mxu0 0.0
    %1580 = vmatpush1.msra.mxu0 %v1560
    %1581 = vmatprep.subr.mxu0 0.0
    %1582 = vmatpush1.msra.mxu0 %v1561
    %1583 = vmatprep.subr.mxu0 0.0
    %1584 = vmatpush1.msra.mxu0 0.0
    %1585 = vmatprep.subr.mxu0 0.0
    %1586 = vmatpush1.msra.mxu0 0.0
    %1587 = vmatprep.subr.mxu0 0.0
    %1588 = vmatpush1.msra.mxu0 0.0
    %1589 = vmatprep.subr.mxu0 0.0
    %1590 = vmatpush1.msra.mxu0 0.0
    %1591 = vmatprep.subr.mxu0 0.0
    %1592 = vmatpush1.msra.mxu0 0.0
    %1593 = vmatprep.subr.mxu0 0.0
    %1594 = vmatpush1.msra.mxu0 0.0
    %1595 = vmatprep.subr.mxu0 0.0
    %1596 = vmatpush1.msra.mxu0 0.0
    %1597 = vmatprep.subr.mxu0 0.0
    %1598 = vmatpush1.msra.mxu0 0.0
    %1599 = vmatprep.subr.mxu0 0.0
    %1600 = vmatpush1.msra.mxu0 0.0
    %1601 = vmatprep.subr.mxu0 0.0
    %1602 = vmatpush1.msra.mxu0 0.0
    %1603 = vmatprep.subr.mxu0 0.0
    %1604 = vmatpush1.msra.mxu0 0.0
    %1605 = vmatprep.subr.mxu0 0.0
    %1606 = vmatpush1.msra.mxu0 0.0
    %1607 = vmatprep.subr.mxu0 0.0
    %1608 = vmatpush1.msra.mxu0 0.0
    %1609 = vmatprep.subr.mxu0 0.0
    %1610 = vmatpush1.msra.mxu0 0.0
    %1611 = vmatprep.subr.mxu0 0.0
    %1612 = vmatpush1.msra.mxu0 0.0
    %1613 = vmatprep.subr.mxu0 0.0
    %1614 = vmatpush1.msra.mxu0 0.0
    %1615 = vmatprep.subr.mxu0 0.0
    %1616 = vmatpush1.msra.mxu0 0.0
    %1617 = vmatprep.subr.mxu0 0.0
    %1618 = vmatpush1.msra.mxu0 0.0
    %1619 = vmatprep.subr.mxu0 0.0
    %1620 = vmatpush1.msra.mxu0 0.0
    %1621 = vmatprep.subr.mxu0 0.0
    %1622 = vmatpush1.msra.mxu0 0.0
    %1623 = vmatprep.subr.mxu0 0.0
    %1624 = vmatpush1.msra.mxu0 0.0
    %1625 = vmatprep.subr.mxu0 0.0
    %1626 = vmatpush1.msra.mxu0 0.0
    %1627 = vmatprep.subr.mxu0 0.0
    %1628 = vmatpush1.msra.mxu0 0.0
    %1629 = vmatprep.subr.mxu0 0.0
    %1630 = vmatpush1.msra.mxu0 0.0
    %1631 = vmatprep.subr.mxu0 0.0
    %1632 = vmatpush1.msra.mxu0 0.0
    %1633 = vmatprep.subr.mxu0 0.0
    %1634 = vmatpush1.msra.mxu0 0.0
    %1635 = vmatprep.subr.mxu0 0.0
    %1636 = vmatpush1.msra.mxu0 0.0
    %1637 = vmatprep.subr.mxu0 0.0
    %1638 = vmatpush1.msra.mxu0 0.0
    %1639 = vmatprep.mubr.f32.mxu0 0.0
    %1640 = vmatmul.mubr.f32.gmra.mrb[0].mxu0 %v1570
    %v1641 = vpop.f32.mrb[0].mxu0
    %v1642 = vadd.f32 %v1567, %v1641
    %v1643 = vpop.f32.mrb[0].mxu0
    %1644 = vmatprep.mubr.f32.mxu0 0.0
    %1645 = vmatmul.mubr.f32.gmra.mrb[0].mxu0 %v1573
    %v1646 = vpop.f32.mrb[0].mxu0
    %v1647 = vadd.f32 %v1567, %v1646
    %v1648 = vpop.f32.mrb[0].mxu0
    %1649 = vdwg.mxu0
    %v1650 = vadd.f32 %v59, %v1642
    %v1651 = vadd.f32 %v60, %v1647
    %v1652 = vld [vmem:[%s7] sm:$0x1]
    %v1653 = vld [vmem:[%s8] sm:$0x1]
    %v1654 = vsel %vm63, %v1650, 0.0
    %1655 = vadd.xlane.f32.xlu0 %v1654
    %v1656 = vpop.xlane.xlu0 %1655
    %v1657 = vsel %vm63, %v1651, 0.0
    %1658 = vadd.xlane.f32.xlu0 %v1657
    %v1659 = vpop.xlane.xlu0 %1658
    %v1660 = vmul.f32 %v1656, %v70
    %v1661 = vmul.f32 %v1659, %v70
    %v1662 = vsub.f32 %v1650, %v1660
    %v1663 = vsub.f32 %v1651, %v1661
    %v1664 = vmul.f32 %v1662, %v1662
    %v1665 = vmul.f32 %v1663, %v1663
    %v1666 = vsel %vm63, %v1664, 0.0
    %1667 = vadd.xlane.f32.xlu0 %v1666
    %v1668 = vpop.xlane.xlu0 %1667
    %v1669 = vsel %vm63, %v1665, 0.0
    %1670 = vadd.xlane.f32.xlu0 %v1669
    %v1671 = vpop.xlane.xlu0 %1670
    %v1672 = vmul.f32 %v1668, %v70
    %v1673 = vmul.f32 %v1671, %v70
    %v1674 = vadd.f32 %v1672, 1e-05
    %v1675 = vadd.f32 %v1673, 1e-05
    %v1676 = vrsqrt.pop %v1674
    %v1677 = vrsqrt.pop %v1675
    %v1678 = vmul.f32 %v1662, %v1676
    %v1679 = vmul.f32 %v1663, %v1677
    %v1681 = vlaneseq
    %v1682 = vshrl.u32 %v1681, 7
    %v1683 = vsub.s32 0, %v1682
    %v1684 = vrot.slane %v1652, %v1683
    %v1686 = vmul.f32 %v1678, %v1684
    %v1687 = vmul.f32 %v1679, %v1684
    %v1689 = vlaneseq
    %v1690 = vshrl.u32 %v1689, 7
    %v1691 = vsub.s32 0, %v1690
    %v1692 = vrot.slane %v1653, %v1691
    %v1694 = vadd.f32 %v1686, %v1692
    %v1695 = vadd.f32 %v1687, %v1692
    %v1696 = vld [vmem:[%s9] sm:$0xff]
    %v1697 = vld [vmem:[%s9 + $0x8] sm:$0xff]
    %v1698 = vld [vmem:[%s9 + $0x10] sm:$0xff]
    %v1699 = vld [vmem:[%s9 + $0x18] sm:$0xff]
    %v1700 = vld [vmem:[%s10] sm:$0x1]
    %v1702 = vlaneseq
    %v1703 = vshrl.u32 %v1702, 7
    %v1704 = vsub.s32 0, %v1703
    %v1705 = vrot.slane %v1700, %v1704
    %v1708 = vsel %vm63, %v1694, 0
    %v1711 = vsel %vm63, %v1695, 0
    %1713 = vmatprep.subr.mxu0 0.0
    %1714 = vmatpush1.msra.mxu0 %v1696
    %1715 = vmatprep.subr.mxu0 0.0
    %1716 = vmatpush1.msra.mxu0 %v1697
    %1717 = vmatprep.subr.mxu0 0.0
    %1718 = vmatpush1.msra.mxu0 %v1698
    %1719 = vmatprep.subr.mxu0 0.0
    %1720 = vmatpush1.msra.mxu0 %v1699
    %1721 = vmatprep.subr.mxu0 0.0
    %1722 = vmatpush1.msra.mxu0 0.0
    %1723 = vmatprep.subr.mxu0 0.0
    %1724 = vmatpush1.msra.mxu0 0.0
    %1725 = vmatprep.subr.mxu0 0.0
    %1726 = vmatpush1.msra.mxu0 0.0
    %1727 = vmatprep.subr.mxu0 0.0
    %1728 = vmatpush1.msra.mxu0 0.0
    %1729 = vmatprep.subr.mxu0 0.0
    %1730 = vmatpush1.msra.mxu0 0.0
    %1731 = vmatprep.subr.mxu0 0.0
    %1732 = vmatpush1.msra.mxu0 0.0
    %1733 = vmatprep.subr.mxu0 0.0
    %1734 = vmatpush1.msra.mxu0 0.0
    %1735 = vmatprep.subr.mxu0 0.0
    %1736 = vmatpush1.msra.mxu0 0.0
    %1737 = vmatprep.subr.mxu0 0.0
    %1738 = vmatpush1.msra.mxu0 0.0
    %1739 = vmatprep.subr.mxu0 0.0
    %1740 = vmatpush1.msra.mxu0 0.0
    %1741 = vmatprep.subr.mxu0 0.0
    %1742 = vmatpush1.msra.mxu0 0.0
    %1743 = vmatprep.subr.mxu0 0.0
    %1744 = vmatpush1.msra.mxu0 0.0
    %1745 = vmatprep.subr.mxu0 0.0
    %1746 = vmatpush1.msra.mxu0 0.0
    %1747 = vmatprep.subr.mxu0 0.0
    %1748 = vmatpush1.msra.mxu0 0.0
    %1749 = vmatprep.subr.mxu0 0.0
    %1750 = vmatpush1.msra.mxu0 0.0
    %1751 = vmatprep.subr.mxu0 0.0
    %1752 = vmatpush1.msra.mxu0 0.0
    %1753 = vmatprep.subr.mxu0 0.0
    %1754 = vmatpush1.msra.mxu0 0.0
    %1755 = vmatprep.subr.mxu0 0.0
    %1756 = vmatpush1.msra.mxu0 0.0
    %1757 = vmatprep.subr.mxu0 0.0
    %1758 = vmatpush1.msra.mxu0 0.0
    %1759 = vmatprep.subr.mxu0 0.0
    %1760 = vmatpush1.msra.mxu0 0.0
    %1761 = vmatprep.subr.mxu0 0.0
    %1762 = vmatpush1.msra.mxu0 0.0
    %1763 = vmatprep.subr.mxu0 0.0
    %1764 = vmatpush1.msra.mxu0 0.0
    %1765 = vmatprep.subr.mxu0 0.0
    %1766 = vmatpush1.msra.mxu0 0.0
    %1767 = vmatprep.subr.mxu0 0.0
    %1768 = vmatpush1.msra.mxu0 0.0
    %1769 = vmatprep.subr.mxu0 0.0
    %1770 = vmatpush1.msra.mxu0 0.0
    %1771 = vmatprep.subr.mxu0 0.0
    %1772 = vmatpush1.msra.mxu0 0.0
    %1773 = vmatprep.subr.mxu0 0.0
    %1774 = vmatpush1.msra.mxu0 0.0
    %1775 = vmatprep.subr.mxu0 0.0
    %1776 = vmatpush1.msra.mxu0 0.0
    %1777 = vmatprep.mubr.f32.mxu0 0.0
    %1778 = vmatmul.mubr.f32.gmra.mrb[0].mxu0 %v1708
    %v1779 = vpop.f32.mrb[0].mxu0
    %v1780 = vadd.f32 %v1705, %v1779
    %v1781 = vpop.f32.mrb[0].mxu0
    %1782 = vmatprep.mubr.f32.mxu0 0.0
    %1783 = vmatmul.mubr.f32.gmra.mrb[0].mxu0 %v1711
    %v1784 = vpop.f32.mrb[0].mxu0
    %v1785 = vadd.f32 %v1705, %v1784
    %v1786 = vpop.f32.mrb[0].mxu0
    %1787 = vdwg.mxu0
    %v1788 = vmul.f32 %v1780, 0.5
    %v1789 = vmul.f32 %v1785, 0.5
    %v1790 = vmul.f32 %v1780, 0.70710677
    %v1791 = vmul.f32 %v1785, 0.70710677
    %v1792 = verf.f32.pop %v1790
    %v1793 = verf.f32.pop %v1791
    %v1794 = vadd.f32 %v1792, 1.0
    %v1795 = vadd.f32 %v1793, 1.0
    %v1796 = vmul.f32 %v1788, %v1794
    %v1797 = vmul.f32 %v1789, %v1795
    %v1798 = vld [vmem:[%s11] sm:$0xff]
    %v1799 = vld [vmem:[%s11 + $0x8] sm:$0xff]
    %v1800 = vld [vmem:[%s11 + $0x10] sm:$0xff]
    %v1801 = vld [vmem:[%s11 + $0x18] sm:$0xff]
    %v1802 = vld [vmem:[%s11 + $0x20] sm:$0xff]
    %v1803 = vld [vmem:[%s11 + $0x28] sm:$0xff]
    %v1804 = vld [vmem:[%s11 + $0x30] sm:$0xff]
    %v1805 = vld [vmem:[%s11 + $0x38] sm:$0xff]
    %v1806 = vld [vmem:[%s12] sm:$0x1]
    %v1808 = vlaneseq
    %v1809 = vshrl.u32 %v1808, 7
    %v1810 = vsub.s32 0, %v1809
    %v1811 = vrot.slane %v1806, %v1810
    %vm1813 = vcmask 523264
    %v1815 = vsel %vm1813, %v1796, 0
    %v1818 = vsel %vm1813, %v1797, 0
    %1820 = vmatprep.subr.mxu0 0.0
    %1821 = vmatpush1.msra.mxu0 %v1798
    %1822 = vmatprep.subr.mxu0 0.0
    %1823 = vmatpush1.msra.mxu0 %v1799
    %1824 = vmatprep.subr.mxu0 0.0
    %1825 = vmatpush1.msra.mxu0 %v1800
    %1826 = vmatprep.subr.mxu0 0.0
    %1827 = vmatpush1.msra.mxu0 %v1801
    %1828 = vmatprep.subr.mxu0 0.0
    %1829 = vmatpush1.msra.mxu0 %v1802
    %1830 = vmatprep.subr.mxu0 0.0
    %1831 = vmatpush1.msra.mxu0 %v1803
    %1832 = vmatprep.subr.mxu0 0.0
    %1833 = vmatpush1.msra.mxu0 %v1804
    %1834 = vmatprep.subr.mxu0 0.0
    %1835 = vmatpush1.msra.mxu0 %v1805
    %1836 = vmatprep.subr.mxu0 0.0
    %1837 = vmatpush1.msra.mxu0 0.0
    %1838 = vmatprep.subr.mxu0 0.0
    %1839 = vmatpush1.msra.mxu0 0.0
    %1840 = vmatprep.subr.mxu0 0.0
    %1841 = vmatpush1.msra.mxu0 0.0
    %1842 = vmatprep.subr.mxu0 0.0
    %1843 = vmatpush1.msra.mxu0 0.0
    %1844 = vmatprep.subr.mxu0 0.0
    %1845 = vmatpush1.msra.mxu0 0.0
    %1846 = vmatprep.subr.mxu0 0.0
    %1847 = vmatpush1.msra.mxu0 0.0
    %1848 = vmatprep.subr.mxu0 0.0
    %1849 = vmatpush1.msra.mxu0 0.0
    %1850 = vmatprep.subr.mxu0 0.0
    %1851 = vmatpush1.msra.mxu0 0.0
    %1852 = vmatprep.subr.mxu0 0.0
    %1853 = vmatpush1.msra.mxu0 0.0
    %1854 = vmatprep.subr.mxu0 0.0
    %1855 = vmatpush1.msra.mxu0 0.0
    %1856 = vmatprep.subr.mxu0 0.0
    %1857 = vmatpush1.msra.mxu0 0.0
    %1858 = vmatprep.subr.mxu0 0.0
    %1859 = vmatpush1.msra.mxu0 0.0
    %1860 = vmatprep.subr.mxu0 0.0
    %1861 = vmatpush1.msra.mxu0 0.0
    %1862 = vmatprep.subr.mxu0 0.0
    %1863 = vmatpush1.msra.mxu0 0.0
    %1864 = vmatprep.subr.mxu0 0.0
    %1865 = vmatpush1.msra.mxu0 0.0
    %1866 = vmatprep.subr.mxu0 0.0
    %1867 = vmatpush1.msra.mxu0 0.0
    %1868 = vmatprep.subr.mxu0 0.0
    %1869 = vmatpush1.msra.mxu0 0.0
    %1870 = vmatprep.subr.mxu0 0.0
    %1871 = vmatpush1.msra.mxu0 0.0
    %1872 = vmatprep.subr.mxu0 0.0
    %1873 = vmatpush1.msra.mxu0 0.0
    %1874 = vmatprep.subr.mxu0 0.0
    %1875 = vmatpush1.msra.mxu0 0.0
    %1876 = vmatprep.subr.mxu0 0.0
    %1877 = vmatpush1.msra.mxu0 0.0
    %1878 = vmatprep.subr.mxu0 0.0
    %1879 = vmatpush1.msra.mxu0 0.0
    %1880 = vmatprep.subr.mxu0 0.0
    %1881 = vmatpush1.msra.mxu0 0.0
    %1882 = vmatprep.subr.mxu0 0.0
    %1883 = vmatpush1.msra.mxu0 0.0
    %1884 = vmatprep.mubr.f32.mxu0 0.0
    %1885 = vmatmul.mubr.f32.gmra.mrb[0].mxu0 %v1815
    %v1886 = vpop.f32.mrb[0].mxu0
    %v1887 = vadd.f32 %v1811, %v1886
    %v1888 = vpop.f32.mrb[0].mxu0
    %1889 = vmatprep.mubr.f32.mxu0 0.0
    %1890 = vmatmul.mubr.f32.gmra.mrb[0].mxu0 %v1818
    %v1891 = vpop.f32.mrb[0].mxu0
    %v1892 = vadd.f32 %v1811, %v1891
    %v1893 = vpop.f32.mrb[0].mxu0
    %1894 = vdwg.mxu0
    %v1895 = vadd.f32 %v1650, %v1887
    %v1896 = vadd.f32 %v1651, %v1892
    %1897 = vst.msk [vmem:[#allocation5] sm:$0xff] %vm63, %v1895
    %1898 = vst.msk [vmem:[#allocation5 + $0x8] sm:$0xff] %vm63, %v1896
    // Predicated region
    $region58: #{tpu_custom_call.1} parent=1 // pred_check
      _
    $region59: #{tpu_custom_call.1} parent=1 // pred_check_branch
      %1900 = sbr.rel (0) target = $region61
    $region60: #{tpu_custom_call.1} parent=1 // pred_region
      %s1902 = ssub.s32 256, 256
      %1903 = vsyncadd [#allocation4], %s1902
      %s1904 = sshll.u32 [#allocation5], 4
      %s1905 = int_to_ptr.vmem [resolvable:$true] %s1904
      %1910 = dma.vmem_to_hbm [thread:$0]  %s1905, 256, %s13, [#allocation4], 128, 128, 8
    $region61: #{tpu_custom_call.1} parent=1 // pred_fallthru
      _
    // Predicated region
    $region62: #{tpu_custom_call.1} parent=1 // pred_check
      _
    $region63: #{tpu_custom_call.1} parent=1 // pred_check_branch
      %1912 = sbr.rel (0) target = $region65
    $region64: #{tpu_custom_call.1} parent=1 // pred_region
      %1913 = dma.done [#allocation4], 256
    $region65: #{tpu_custom_call.1} parent=1 // pred_fallthru
      _
    %1914 = vsyncpa [#allocation3], 1
    %1915 = vsyncpa [#allocation4], 1

</llo_original>
